<compile_context>
chip_gen: v7x
topology: tpu7x:2x2x1
jax: 0.10.0
libtpu: 0.0.40
codegen_flags: <defaults>
</compile_context>

<pallas_src>
import jax
import jax.numpy as jnp
from jax import lax
from jax.experimental import pallas as pl
from jax.experimental.pallas import tpu as pltpu

NEG_SLOPE = 0.01     # torch.nn.LeakyReLU default
BN_EPS = 1e-5        # torch.nn.BatchNorm2d default


def _leaky(x):
    return jnp.maximum(x, NEG_SLOPE * x)


def _vmem_capacity_bytes():
    """Per-TensorCore VMEM capacity; conservative fallback if query fails."""
    try:
        info = pltpu.get_tpu_info()
        cap = getattr(info, "vmem_capacity_bytes", None)
        if cap:
            return int(cap)
    except Exception:
        pass
    return 64 << 20   # v7x per-core VMEM — the smallest of v5e/v6e/v7x


def _choose_hw_tile(hw, c, max_bytes):
    """Pick (hw_pad, thw): a lane-dense spatial tile that always fits budget.

    If a full (c, hw) f32 block fits, use it (single tile, no padding).
    Otherwise pad HW up to a multiple of 128 and pick the largest divisor of
    the padded extent that is a multiple of 128 and fits the budget (128
    always works), so we never fall back to an over-budget giant block.
    """
    if hw * c * 4 <= max_bytes:
        return hw, hw
    hw_pad = ((hw + 127) // 128) * 128
    best, t = 128, 128
    while t <= hw_pad:
        if hw_pad % t == 0 and t * c * 4 <= max_bytes:
            best = t
        t += 128
    return hw_pad, best


# ---------------------------------------------------------------------------
# Pass 1: 1x1 conv (per-batch MXU matmul) + BN1 partial stats, y stored bf16
# ---------------------------------------------------------------------------
def conv_bn_stats(x3, w, b_col, thw, hw_valid, vmem_limit):
    N, Cin, HWp = x3.shape
    Cout = w.shape[0]
    nt = HWp // thw
    masked = hw_valid != HWp

    def kernel(x_ref, w_ref, b_ref, y_ref, s_ref, sq_ref):
        # TODO(synk): at realistic channel counts (C >= 128) cast x/w to bf16
        # for the dot (keep preferred_element_type=f32) and tile Cin/Cout with
        # an 'arbitrary' K axis + f32 VMEM accumulator; at C=16 the matmul is
        # noise and f32 keeps tight numerics.
        y = jnp.dot(w_ref[...], x_ref[0],
                    preferred_element_type=jnp.float32) + b_ref[...]
        y_ref[...] = y.astype(y_ref.dtype)[None]          # bf16 store (halved HBM)
        if masked:
            col = (pl.program_id(1) * thw
                   + lax.broadcasted_iota(jnp.int32, y.shape, 1))
            y = jnp.where(col < hw_valid, y, 0.0)
        # per-(batch, tile, channel) partials; lane reduction goes to the XLU.
        s_ref[...] = jnp.sum(y, axis=-1, keepdims=True)[None, None]
        sq_ref[...] = jnp.sum(y * y, axis=-1, keepdims=True)[None, None]

    return pl.pallas_call(
        kernel,
        out_shape=(jax.ShapeDtypeStruct((N, Cout, HWp), jnp.bfloat16),
                   jax.ShapeDtypeStruct((N, nt, Cout, 1), jnp.float32),
                   jax.ShapeDtypeStruct((N, nt, Cout, 1), jnp.float32)),
        grid=(N, nt),
        in_specs=[pl.BlockSpec((1, Cin, thw), lambda b, t: (b, 0, t)),
                  pl.BlockSpec((Cout, Cin), lambda b, t: (0, 0)),
                  pl.BlockSpec((Cout, 1), lambda b, t: (0, 0))],
        out_specs=(pl.BlockSpec((1, Cout, thw), lambda b, t: (b, 0, t)),
                   pl.BlockSpec((1, 1, Cout, 1), lambda b, t: (b, t, 0, 0)),
                   pl.BlockSpec((1, 1, Cout, 1), lambda b, t: (b, t, 0, 0))),
        compiler_params=pltpu.CompilerParams(
            dimension_semantics=("parallel", "parallel"),
            vmem_limit_bytes=vmem_limit),
    )(x3, w, b_col)


# ---------------------------------------------------------------------------
# Pass 2: stats-only — recompute z = LeakyReLU(BN1(y)), emit sum(z)/sum(z^2)
# ---------------------------------------------------------------------------
def bn_act_stats(y3, scale_col, shift_col, thw, hw_valid, vmem_limit):
    N, Cout, HWp = y3.shape
    nt = HWp // thw
    masked = hw_valid != HWp

    def kernel(y_ref, sc_ref, sh_ref, s_ref, sq_ref):
        z = y_ref[0].astype(jnp.float32) * sc_ref[...] + sh_ref[...]
        z = jnp.maximum(z, NEG_SLOPE * z)
        if masked:
            col = (pl.program_id(1) * thw
                   + lax.broadcasted_iota(jnp.int32, z.shape, 1))
            z = jnp.where(col < hw_valid, z, 0.0)
        s_ref[...] = jnp.sum(z, axis=-1, keepdims=True)[None, None]
        sq_ref[...] = jnp.sum(z * z, axis=-1, keepdims=True)[None, None]

    return pl.pallas_call(
        kernel,
        out_shape=(jax.ShapeDtypeStruct((N, nt, Cout, 1), jnp.float32),
                   jax.ShapeDtypeStruct((N, nt, Cout, 1), jnp.float32)),
        grid=(N, nt),
        in_specs=[pl.BlockSpec((1, Cout, thw), lambda b, t: (b, 0, t)),
                  pl.BlockSpec((Cout, 1), lambda b, t: (0, 0)),
                  pl.BlockSpec((Cout, 1), lambda b, t: (0, 0))],
        out_specs=(pl.BlockSpec((1, 1, Cout, 1), lambda b, t: (b, t, 0, 0)),
                   pl.BlockSpec((1, 1, Cout, 1), lambda b, t: (b, t, 0, 0))),
        compiler_params=pltpu.CompilerParams(
            dimension_semantics=("parallel", "parallel"),
            vmem_limit_bytes=vmem_limit),
    )(y3, scale_col, shift_col)


# ---------------------------------------------------------------------------
# Pass 3: recompute z, apply SE gate + folded BN2 affine + LeakyReLU
# ---------------------------------------------------------------------------
def se_bn_act(y3, scale1_col, shift1_col, a_bc, d_col, thw, vmem_limit):
    N, Cout, HWp = y3.shape
    nt = HWp // thw

    def kernel(y_ref, sc1_ref, sh1_ref, a_ref, d_ref, o_ref):
        z = y_ref[0].astype(jnp.float32) * sc1_ref[...] + sh1_ref[...]
        z = jnp.maximum(z, NEG_SLOPE * z)
        v = z * a_ref[0] + d_ref[...]
        o_ref[...] = jnp.maximum(v, NEG_SLOPE * v)[None]

    return pl.pallas_call(
        kernel,
        out_shape=jax.ShapeDtypeStruct((N, Cout, HWp), jnp.float32),
        grid=(N, nt),
        in_specs=[pl.BlockSpec((1, Cout, thw), lambda b, t: (b, 0, t)),
                  pl.BlockSpec((Cout, 1), lambda b, t: (0, 0)),
                  pl.BlockSpec((Cout, 1), lambda b, t: (0, 0)),
                  pl.BlockSpec((1, Cout, 1), lambda b, t: (b, 0, 0)),
                  pl.BlockSpec((Cout, 1), lambda b, t: (0, 0))],
        out_specs=pl.BlockSpec((1, Cout, thw), lambda b, t: (b, 0, t)),
        compiler_params=pltpu.CompilerParams(
            dimension_semantics=("parallel", "parallel"),
            vmem_limit_bytes=vmem_limit),
    )(y3, scale1_col, shift1_col, a_bc, d_col)


# ---------------------------------------------------------------------------
# Full forward pass
# ---------------------------------------------------------------------------
@jax.jit
def conv2d_channel_forward(x_nchw, params):
    N, Cin, H, W = x_nchw.shape
    w = params["conv_w"]                      # (Cout, Cin)
    Cout = w.shape[0]
    HW = H * W
    M = N * HW                                # elements per channel for BN

    # Generation-aware tile / VMEM budgets (v5e/v6e: 128 MiB, v7x: 64 MiB).
    cap = _vmem_capacity_bytes()
    tile_budget = max(1 << 20, min(8 << 20, cap // 16))
    vmem_limit = int(min(cap // 2, 64 << 20))

    hw_pad, thw = _choose_hw_tile(HW, max(Cin, Cout), tile_budget)

    x3 = x_nchw.reshape(N, Cin, HW)           # NCHW kept; free reshape
    if hw_pad != HW:
        x3 = jnp.pad(x3, ((0, 0), (0, 0), (0, hw_pad - HW)))

    # ---- pass 1: conv + bias -> bf16 y, BN1 partial stats ------------------
    y, s1, sq1 = conv_bn_stats(x3, w, params["conv_b"].reshape(Cout, 1),
                               thw, HW, vmem_limit)
    # TODO(synk): for very large M switch to a compensated / two-pass variance
    # if E[x^2]-E[x]^2 cancellation becomes an accuracy issue.
    sum1 = jnp.sum(s1[..., 0], axis=(0, 1))               # (Cout,)
    sumsq1 = jnp.sum(sq1[..., 0], axis=(0, 1))
    mean1 = sum1 / M
    var1 = jnp.maximum(sumsq1 / M - mean1 * mean1, 0.0)
    scale1 = params["bn1_g"] * jax.lax.rsqrt(var1 + BN_EPS)
    shift1 = params["bn1_b"] - mean1 * scale1
    scale1_col = scale1.reshape(Cout, 1)
    shift1_col = shift1.reshape(Cout, 1)

    # ---- pass 2: z recomputed on the fly, SE pool + z^2 moments only -------
    s2, sq2 = bn_act_stats(y, scale1_col, shift1_col, thw, HW, vmem_limit)
    S1 = jnp.sum(s2[..., 0], axis=1)                       # (N, Cout) sum z
    S2 = jnp.sum(sq2[..., 0], axis=1)                      # (N, Cout) sum z^2

    # SE MLP on the pooled (N, Cout) tensor: plain JAX (tiny).
    pool = S1 / HW
    h = _leaky(pool @ params["fc1_w"] + params["fc1_b"])
    gate = jax.nn.sigmoid(h @ params["fc2_w"] + params["fc2_b"])   # (N, Cout)

    # BN2 batch stats of u = z * gate, computed analytically (u never built).
    usum = jnp.sum(gate * S1, axis=0)
    usumsq = jnp.sum(gate * gate * S2, axis=0)
    mean2 = usum / M
    var2 = jnp.maximum(usumsq / M - mean2 * mean2, 0.0)
    scale2 = params["bn2_g"] * jax.lax.rsqrt(var2 + BN_EPS)
    shift2 = params["bn2_b"] - mean2 * scale2

    a_bc = (gate * scale2[None, :]).reshape(N, Cout, 1)    # per-(b,c) scale
    d_col = shift2.reshape(Cout, 1)                        # per-channel shift

    # ---- pass 3: recompute z, gate + BN2 + LeakyReLU, single output write --
    out3 = se_bn_act(y, scale1_col, shift1_col, a_bc, d_col, thw, vmem_limit)
    if hw_pad != HW:
        out3 = out3[:, :, :HW]
    return out3.reshape(N, Cout, H, W)


# ---------------------------------------------------------------------------
# Pure-JAX reference (faithful to the PyTorch module, f32 throughout)
# ---------------------------------------------------------------------------
def reference_forward(x, p):
    def bn_train(t, g, b):
        m = t.mean(axis=(0, 2, 3))
        v = t.var(axis=(0, 2, 3))        # biased variance (training-mode BN)
        return ((t - m[None, :, None, None])
                * (g / jnp.sqrt(v + BN_EPS))[None, :, None, None]
                + b[None, :, None, None])

    y = jnp.einsum('nchw,dc->ndhw', x, p["conv_w"]) + p["conv_b"][None, :, None, None]
    z = _leaky(bn_train(y, p["bn1_g"], p["bn1_b"]))
    pool = z.mean(axis=(2, 3))
    h = _leaky(pool @ p["fc1_w"] + p["fc1_b"])
    gate = jax.nn.sigmoid(h @ p["fc2_w"] + p["fc2_b"])
    u = z * gate[:, :, None, None]
    return _leaky(bn_train(u, p["bn2_g"], p["bn2_b"]))


if __name__ == "__main__":
    N, Cin, Cout, H, W = 2, 16, 16, 16, 16
    Cr = Cout // 8                       # reduction_ratio = 8

    key = jax.random.PRNGKey(0)
    ks = jax.random.split(key, 11)
    f32 = jnp.float32

    params = {
        # conv1: torch weight (Cout, Cin, 1, 1) stored as (Cout, Cin)
        "conv_w": 0.2 * jax.random.normal(ks[0], (Cout, Cin), f32),
        "conv_b": 0.1 * jax.random.normal(ks[1], (Cout,), f32),
        "bn1_g": 1.0 + 0.1 * jax.random.normal(ks[2], (Cout,), f32),
        "bn1_b": 0.1 * jax.random.normal(ks[3], (Cout,), f32),
        # fc1: torch weight (Cr, Cout) stored transposed as (Cout, Cr)
        "fc1_w": 0.3 * jax.random.normal(ks[4], (Cout, Cr), f32),
        "fc1_b": 0.1 * jax.random.normal(ks[5], (Cr,), f32),
        # fc2: torch weight (Cout, Cr) stored transposed as (Cr, Cout)
        "fc2_w": 0.3 * jax.random.normal(ks[6], (Cr, Cout), f32),
        "fc2_b": 0.1 * jax.random.normal(ks[7], (Cout,), f32),
        "bn2_g": 1.0 + 0.1 * jax.random.normal(ks[8], (Cout,), f32),
        "bn2_b": 0.1 * jax.random.normal(ks[9], (Cout,), f32),
    }

    x = jax.random.normal(ks[10], (N, Cin, H, W), f32)

    out = conv2d_channel_forward(x, params)
    out = jax.block_until_ready(out)

    ref = reference_forward(x, params)
    ref = jax.block_until_ready(ref)

    max_err = float(jnp.max(jnp.abs(out - ref)))
    assert out.shape == (N, Cout, H, W), out.shape
    # bf16 intermediate y (0.4% relative rounding) amplified by the two BN
    # affines bounds the pointwise error well below 5e-2 at these scales.
    assert max_err < 5e-2, f"mismatch vs reference, max abs err = {max_err}"

    print("KERNEL_OK")
</pallas_src>

<mosaic_0001>
module attributes {stable_mosaic.version = 11 : i64} {
  func.func @kernel(%arg0: i32, %arg1: i32, %arg2: memref<1x16x256xf32, #tpu.memory_space<vmem>>, %arg3: memref<16x16xf32, #tpu.memory_space<vmem>>, %arg4: memref<16x1xf32, #tpu.memory_space<vmem>>, %arg5: memref<1x16x256xbf16, #tpu.memory_space<vmem>>, %arg6: memref<1x1x16x1xf32, #tpu.memory_space<vmem>>, %arg7: memref<1x1x16x1xf32, #tpu.memory_space<vmem>>) attributes {dimension_semantics = [#tpu.dimension_semantics<parallel>, #tpu.dimension_semantics<parallel>], iteration_bounds = array<i64: 2, 1>, scalar_prefetch = 0 : i64, scratch_operands = 0 : i64, tpu.core_type = #tpu.core_type<tc>, window_params = [{transform_indices = @transform_0, window_bounds = array<i64: 1, 16, 256>}, {pipeline_mode = #tpu.pipeline_mode<synchronous>, transform_indices = @transform_1, window_bounds = array<i64: 16, 16>}, {pipeline_mode = #tpu.pipeline_mode<synchronous>, transform_indices = @transform_2, window_bounds = array<i64: 16, 1>}, {transform_indices = @transform_3, window_bounds = array<i64: 1, 16, 256>}, {transform_indices = @transform_4, window_bounds = array<i64: 1, 1, 16, 1>}, {transform_indices = @transform_5, window_bounds = array<i64: 1, 1, 16, 1>}]} {
    %c0 = arith.constant 0 : index
    %c0_0 = arith.constant 0 : index
    %0 = vector.load %arg3[%c0, %c0_0] : memref<16x16xf32, #tpu.memory_space<vmem>>, vector<16x16xf32>
    %c0_1 = arith.constant 0 : index
    %c0_2 = arith.constant 0 : index
    %c0_3 = arith.constant 0 : index
    %1 = vector.load %arg2[%c0_1, %c0_2, %c0_3] : memref<1x16x256xf32, #tpu.memory_space<vmem>>, vector<1x16x256xf32>
    %2 = vector.shape_cast %1 : vector<1x16x256xf32> to vector<16x256xf32>
    %cst = arith.constant dense<0.000000e+00> : vector<16x256xf32>
    %3 = tpu.matmul %0, %2, %cst {dimension_numbers = #tpu.dot_dimension_numbers<[1], [0], [0], [1], [0, 0, 1, 1], [], []>} : vector<16x16xf32>, vector<16x256xf32>, vector<16x256xf32> -> vector<16x256xf32>
    %c0_4 = arith.constant 0 : index
    %c0_5 = arith.constant 0 : index
    %4 = vector.load %arg4[%c0_4, %c0_5] : memref<16x1xf32, #tpu.memory_space<vmem>>, vector<16x1xf32>
    %5 = vector.broadcast %4 : vector<16x1xf32> to vector<16x256xf32>
    %6 = arith.addf %3, %5 : vector<16x256xf32>
    %7 = arith.truncf %6 : vector<16x256xf32> to vector<16x256xbf16>
    %8 = vector.shape_cast %7 : vector<16x256xbf16> to vector<1x16x256xbf16>
    %c0_6 = arith.constant 0 : index
    %c0_7 = arith.constant 0 : index
    %c0_8 = arith.constant 0 : index
    %9 = vector.load %arg5[%c0_6, %c0_7, %c0_8] : memref<1x16x256xbf16, #tpu.memory_space<vmem>>, vector<1x16x256xbf16>
    tpu.vector_store %arg5[%c0_6, %c0_7, %c0_8], %8 {strides = array<i32>} : memref<1x16x256xbf16, #tpu.memory_space<vmem>>, vector<1x16x256xbf16>,
    %cst_9 = arith.constant dense<0.000000e+00> : vector<16xf32>
    %10 = vector.multi_reduction <add>, %6, %cst_9 [1] : vector<16x256xf32> to vector<16xf32>
    %11 = vector.shape_cast %10 : vector<16xf32> to vector<16x1xf32>
    %12 = vector.shape_cast %11 : vector<16x1xf32> to vector<1x1x16x1xf32>
    %c0_10 = arith.constant 0 : index
    %c0_11 = arith.constant 0 : index
    %c0_12 = arith.constant 0 : index
    %c0_13 = arith.constant 0 : index
    %13 = vector.load %arg6[%c0_10, %c0_11, %c0_12, %c0_13] : memref<1x1x16x1xf32, #tpu.memory_space<vmem>>, vector<1x1x16x1xf32>
    tpu.vector_store %arg6[%c0_10, %c0_11, %c0_12, %c0_13], %12 {strides = array<i32>} : memref<1x1x16x1xf32, #tpu.memory_space<vmem>>, vector<1x1x16x1xf32>,
    %14 = arith.mulf %6, %6 : vector<16x256xf32>
    %cst_14 = arith.constant dense<0.000000e+00> : vector<16xf32>
    %15 = vector.multi_reduction <add>, %14, %cst_14 [1] : vector<16x256xf32> to vector<16xf32>
    %16 = vector.shape_cast %15 : vector<16xf32> to vector<16x1xf32>
    %17 = vector.shape_cast %16 : vector<16x1xf32> to vector<1x1x16x1xf32>
    %c0_15 = arith.constant 0 : index
    %c0_16 = arith.constant 0 : index
    %c0_17 = arith.constant 0 : index
    %c0_18 = arith.constant 0 : index
    %18 = vector.load %arg7[%c0_15, %c0_16, %c0_17, %c0_18] : memref<1x1x16x1xf32, #tpu.memory_space<vmem>>, vector<1x1x16x1xf32>
    tpu.vector_store %arg7[%c0_15, %c0_16, %c0_17, %c0_18], %17 {strides = array<i32>} : memref<1x1x16x1xf32, #tpu.memory_space<vmem>>, vector<1x1x16x1xf32>,
    return
  }
  func.func @transform_0(%arg0: i32, %arg1: i32) -> (i32, i32, i32) {
    %c0_i32 = arith.constant 0 : i32
    %c0_i32_0 = arith.constant 0 : i32
    return %arg0, %c0_i32, %arg1 : i32, i32, i32
  }
  func.func @transform_1(%arg0: i32, %arg1: i32) -> (i32, i32) {
    %c0_i32 = arith.constant 0 : i32
    %c0_i32_0 = arith.constant 0 : i32
    %c0_i32_1 = arith.constant 0 : i32
    return %c0_i32, %c0_i32_0 : i32, i32
  }
  func.func @transform_2(%arg0: i32, %arg1: i32) -> (i32, i32) {
    %c0_i32 = arith.constant 0 : i32
    %c0_i32_0 = arith.constant 0 : i32
    %c0_i32_1 = arith.constant 0 : i32
    return %c0_i32, %c0_i32_0 : i32, i32
  }
  func.func @transform_3(%arg0: i32, %arg1: i32) -> (i32, i32, i32) {
    %c0_i32 = arith.constant 0 : i32
    %c0_i32_0 = arith.constant 0 : i32
    return %arg0, %c0_i32, %arg1 : i32, i32, i32
  }
  func.func @transform_4(%arg0: i32, %arg1: i32) -> (i32, i32, i32, i32) {
    %c0_i32 = arith.constant 0 : i32
    %c0_i32_0 = arith.constant 0 : i32
    %c0_i32_1 = arith.constant 0 : i32
    return %arg0, %arg1, %c0_i32, %c0_i32_0 : i32, i32, i32, i32
  }
  func.func @transform_5(%arg0: i32, %arg1: i32) -> (i32, i32, i32, i32) {
    %c0_i32 = arith.constant 0 : i32
    %c0_i32_0 = arith.constant 0 : i32
    %c0_i32_1 = arith.constant 0 : i32
    return %arg0, %arg1, %c0_i32, %c0_i32_0 : i32, i32, i32, i32
  }
}

module attributes {stable_mosaic.version = 11 : i64} {
  func.func @kernel(%arg0: i32, %arg1: i32, %arg2: memref<1x16x256xbf16, #tpu.memory_space<vmem>>, %arg3: memref<16x1xf32, #tpu.memory_space<vmem>>, %arg4: memref<16x1xf32, #tpu.memory_space<vmem>>, %arg5: memref<1x1x16x1xf32, #tpu.memory_space<vmem>>, %arg6: memref<1x1x16x1xf32, #tpu.memory_space<vmem>>) attributes {dimension_semantics = [#tpu.dimension_semantics<parallel>, #tpu.dimension_semantics<parallel>], iteration_bounds = array<i64: 2, 1>, scalar_prefetch = 0 : i64, scratch_operands = 0 : i64, tpu.core_type = #tpu.core_type<tc>, window_params = [{transform_indices = @transform_0, window_bounds = array<i64: 1, 16, 256>}, {pipeline_mode = #tpu.pipeline_mode<synchronous>, transform_indices = @transform_1, window_bounds = array<i64: 16, 1>}, {pipeline_mode = #tpu.pipeline_mode<synchronous>, transform_indices = @transform_2, window_bounds = array<i64: 16, 1>}, {transform_indices = @transform_3, window_bounds = array<i64: 1, 1, 16, 1>}, {transform_indices = @transform_4, window_bounds = array<i64: 1, 1, 16, 1>}]} {
    %c0 = arith.constant 0 : index
    %c0_0 = arith.constant 0 : index
    %c0_1 = arith.constant 0 : index
    %0 = vector.load %arg2[%c0, %c0_0, %c0_1] : memref<1x16x256xbf16, #tpu.memory_space<vmem>>, vector<1x16x256xbf16>
    %1 = vector.shape_cast %0 : vector<1x16x256xbf16> to vector<16x256xbf16>
    %2 = arith.extf %1 : vector<16x256xbf16> to vector<16x256xf32>
    %c0_2 = arith.constant 0 : index
    %c0_3 = arith.constant 0 : index
    %3 = vector.load %arg3[%c0_2, %c0_3] : memref<16x1xf32, #tpu.memory_space<vmem>>, vector<16x1xf32>
    %4 = vector.broadcast %3 : vector<16x1xf32> to vector<16x256xf32>
    %5 = arith.mulf %2, %4 : vector<16x256xf32>
    %c0_4 = arith.constant 0 : index
    %c0_5 = arith.constant 0 : index
    %6 = vector.load %arg4[%c0_4, %c0_5] : memref<16x1xf32, #tpu.memory_space<vmem>>, vector<16x1xf32>
    %7 = vector.broadcast %6 : vector<16x1xf32> to vector<16x256xf32>
    %8 = arith.addf %5, %7 : vector<16x256xf32>
    %cst = arith.constant 0.00999999977 : f32
    %9 = vector.broadcast %cst : f32 to vector<16x256xf32>
    %10 = arith.mulf %9, %8 : vector<16x256xf32>
    %11 = arith.maximumf %8, %10 : vector<16x256xf32>
    %cst_6 = arith.constant dense<0.000000e+00> : vector<16xf32>
    %12 = vector.multi_reduction <add>, %11, %cst_6 [1] : vector<16x256xf32> to vector<16xf32>
    %13 = vector.shape_cast %12 : vector<16xf32> to vector<16x1xf32>
    %14 = vector.shape_cast %13 : vector<16x1xf32> to vector<1x1x16x1xf32>
    %c0_7 = arith.constant 0 : index
    %c0_8 = arith.constant 0 : index
    %c0_9 = arith.constant 0 : index
    %c0_10 = arith.constant 0 : index
    %15 = vector.load %arg5[%c0_7, %c0_8, %c0_9, %c0_10] : memref<1x1x16x1xf32, #tpu.memory_space<vmem>>, vector<1x1x16x1xf32>
    tpu.vector_store %arg5[%c0_7, %c0_8, %c0_9, %c0_10], %14 {strides = array<i32>} : memref<1x1x16x1xf32, #tpu.memory_space<vmem>>, vector<1x1x16x1xf32>,
    %16 = arith.mulf %11, %11 : vector<16x256xf32>
    %cst_11 = arith.constant dense<0.000000e+00> : vector<16xf32>
    %17 = vector.multi_reduction <add>, %16, %cst_11 [1] : vector<16x256xf32> to vector<16xf32>
    %18 = vector.shape_cast %17 : vector<16xf32> to vector<16x1xf32>
    %19 = vector.shape_cast %18 : vector<16x1xf32> to vector<1x1x16x1xf32>
    %c0_12 = arith.constant 0 : index
    %c0_13 = arith.constant 0 : index
    %c0_14 = arith.constant 0 : index
    %c0_15 = arith.constant 0 : index
    %20 = vector.load %arg6[%c0_12, %c0_13, %c0_14, %c0_15] : memref<1x1x16x1xf32, #tpu.memory_space<vmem>>, vector<1x1x16x1xf32>
    tpu.vector_store %arg6[%c0_12, %c0_13, %c0_14, %c0_15], %19 {strides = array<i32>} : memref<1x1x16x1xf32, #tpu.memory_space<vmem>>, vector<1x1x16x1xf32>,
    return
  }
  func.func @transform_0(%arg0: i32, %arg1: i32) -> (i32, i32, i32) {
    %c0_i32 = arith.constant 0 : i32
    %c0_i32_0 = arith.constant 0 : i32
    return %arg0, %c0_i32, %arg1 : i32, i32, i32
  }
  func.func @transform_1(%arg0: i32, %arg1: i32) -> (i32, i32) {
    %c0_i32 = arith.constant 0 : i32
    %c0_i32_0 = arith.constant 0 : i32
    %c0_i32_1 = arith.constant 0 : i32
    return %c0_i32, %c0_i32_0 : i32, i32
  }
  func.func @transform_2(%arg0: i32, %arg1: i32) -> (i32, i32) {
    %c0_i32 = arith.constant 0 : i32
    %c0_i32_0 = arith.constant 0 : i32
    %c0_i32_1 = arith.constant 0 : i32
    return %c0_i32, %c0_i32_0 : i32, i32
  }
  func.func @transform_3(%arg0: i32, %arg1: i32) -> (i32, i32, i32, i32) {
    %c0_i32 = arith.constant 0 : i32
    %c0_i32_0 = arith.constant 0 : i32
    %c0_i32_1 = arith.constant 0 : i32
    return %arg0, %arg1, %c0_i32, %c0_i32_0 : i32, i32, i32, i32
  }
  func.func @transform_4(%arg0: i32, %arg1: i32) -> (i32, i32, i32, i32) {
    %c0_i32 = arith.constant 0 : i32
    %c0_i32_0 = arith.constant 0 : i32
    %c0_i32_1 = arith.constant 0 : i32
    return %arg0, %arg1, %c0_i32, %c0_i32_0 : i32, i32, i32, i32
  }
}

module attributes {stable_mosaic.version = 11 : i64} {
  func.func @kernel(%arg0: i32, %arg1: i32, %arg2: memref<1x16x256xbf16, #tpu.memory_space<vmem>>, %arg3: memref<16x1xf32, #tpu.memory_space<vmem>>, %arg4: memref<16x1xf32, #tpu.memory_space<vmem>>, %arg5: memref<1x16x1xf32, #tpu.memory_space<vmem>>, %arg6: memref<16x1xf32, #tpu.memory_space<vmem>>, %arg7: memref<1x16x256xf32, #tpu.memory_space<vmem>>) attributes {dimension_semantics = [#tpu.dimension_semantics<parallel>, #tpu.dimension_semantics<parallel>], iteration_bounds = array<i64: 2, 1>, scalar_prefetch = 0 : i64, scratch_operands = 0 : i64, tpu.core_type = #tpu.core_type<tc>, window_params = [{transform_indices = @transform_0, window_bounds = array<i64: 1, 16, 256>}, {pipeline_mode = #tpu.pipeline_mode<synchronous>, transform_indices = @transform_1, window_bounds = array<i64: 16, 1>}, {pipeline_mode = #tpu.pipeline_mode<synchronous>, transform_indices = @transform_2, window_bounds = array<i64: 16, 1>}, {transform_indices = @transform_3, window_bounds = array<i64: 1, 16, 1>}, {pipeline_mode = #tpu.pipeline_mode<synchronous>, transform_indices = @transform_4, window_bounds = array<i64: 16, 1>}, {transform_indices = @transform_5, window_bounds = array<i64: 1, 16, 256>}]} {
    %c0 = arith.constant 0 : index
    %c0_0 = arith.constant 0 : index
    %c0_1 = arith.constant 0 : index
    %0 = vector.load %arg2[%c0, %c0_0, %c0_1] : memref<1x16x256xbf16, #tpu.memory_space<vmem>>, vector<1x16x256xbf16>
    %1 = vector.shape_cast %0 : vector<1x16x256xbf16> to vector<16x256xbf16>
    %2 = arith.extf %1 : vector<16x256xbf16> to vector<16x256xf32>
    %c0_2 = arith.constant 0 : index
    %c0_3 = arith.constant 0 : index
    %3 = vector.load %arg3[%c0_2, %c0_3] : memref<16x1xf32, #tpu.memory_space<vmem>>, vector<16x1xf32>
    %4 = vector.broadcast %3 : vector<16x1xf32> to vector<16x256xf32>
    %5 = arith.mulf %2, %4 : vector<16x256xf32>
    %c0_4 = arith.constant 0 : index
    %c0_5 = arith.constant 0 : index
    %6 = vector.load %arg4[%c0_4, %c0_5] : memref<16x1xf32, #tpu.memory_space<vmem>>, vector<16x1xf32>
    %7 = vector.broadcast %6 : vector<16x1xf32> to vector<16x256xf32>
    %8 = arith.addf %5, %7 : vector<16x256xf32>
    %cst = arith.constant 0.00999999977 : f32
    %9 = vector.broadcast %cst : f32 to vector<16x256xf32>
    %10 = arith.mulf %9, %8 : vector<16x256xf32>
    %11 = arith.maximumf %8, %10 : vector<16x256xf32>
    %c0_6 = arith.constant 0 : index
    %c0_7 = arith.constant 0 : index
    %c0_8 = arith.constant 0 : index
    %12 = vector.load %arg5[%c0_6, %c0_7, %c0_8] : memref<1x16x1xf32, #tpu.memory_space<vmem>>, vector<1x16x1xf32>
    %13 = vector.shape_cast %12 : vector<1x16x1xf32> to vector<16x1xf32>
    %14 = vector.broadcast %13 : vector<16x1xf32> to vector<16x256xf32>
    %15 = arith.mulf %11, %14 : vector<16x256xf32>
    %c0_9 = arith.constant 0 : index
    %c0_10 = arith.constant 0 : index
    %16 = vector.load %arg6[%c0_9, %c0_10] : memref<16x1xf32, #tpu.memory_space<vmem>>, vector<16x1xf32>
    %17 = vector.broadcast %16 : vector<16x1xf32> to vector<16x256xf32>
    %18 = arith.addf %15, %17 : vector<16x256xf32>
    %cst_11 = arith.constant 0.00999999977 : f32
    %19 = vector.broadcast %cst_11 : f32 to vector<16x256xf32>
    %20 = arith.mulf %19, %18 : vector<16x256xf32>
    %21 = arith.maximumf %18, %20 : vector<16x256xf32>
    %22 = vector.shape_cast %21 : vector<16x256xf32> to vector<1x16x256xf32>
    %c0_12 = arith.constant 0 : index
    %c0_13 = arith.constant 0 : index
    %c0_14 = arith.constant 0 : index
    %23 = vector.load %arg7[%c0_12, %c0_13, %c0_14] : memref<1x16x256xf32, #tpu.memory_space<vmem>>, vector<1x16x256xf32>
    tpu.vector_store %arg7[%c0_12, %c0_13, %c0_14], %22 {strides = array<i32>} : memref<1x16x256xf32, #tpu.memory_space<vmem>>, vector<1x16x256xf32>,
    return
  }
  func.func @transform_0(%arg0: i32, %arg1: i32) -> (i32, i32, i32) {
    %c0_i32 = arith.constant 0 : i32
    %c0_i32_0 = arith.constant 0 : i32
    return %arg0, %c0_i32, %arg1 : i32, i32, i32
  }
  func.func @transform_1(%arg0: i32, %arg1: i32) -> (i32, i32) {
    %c0_i32 = arith.constant 0 : i32
    %c0_i32_0 = arith.constant 0 : i32
    %c0_i32_1 = arith.constant 0 : i32
    return %c0_i32, %c0_i32_0 : i32, i32
  }
  func.func @transform_2(%arg0: i32, %arg1: i32) -> (i32, i32) {
    %c0_i32 = arith.constant 0 : i32
    %c0_i32_0 = arith.constant 0 : i32
    %c0_i32_1 = arith.constant 0 : i32
    return %c0_i32, %c0_i32_0 : i32, i32
  }
  func.func @transform_3(%arg0: i32, %arg1: i32) -> (i32, i32, i32) {
    %c0_i32 = arith.constant 0 : i32
    %c0_i32_0 = arith.constant 0 : i32
    %c0_i32_1 = arith.constant 0 : i32
    return %arg0, %c0_i32, %c0_i32_0 : i32, i32, i32
  }
  func.func @transform_4(%arg0: i32, %arg1: i32) -> (i32, i32) {
    %c0_i32 = arith.constant 0 : i32
    %c0_i32_0 = arith.constant 0 : i32
    %c0_i32_1 = arith.constant 0 : i32
    return %c0_i32, %c0_i32_0 : i32, i32
  }
  func.func @transform_5(%arg0: i32, %arg1: i32) -> (i32, i32, i32) {
    %c0_i32 = arith.constant 0 : i32
    %c0_i32_0 = arith.constant 0 : i32
    return %arg0, %c0_i32, %arg1 : i32, i32, i32
  }
}

</mosaic_0001>

<llo_original>
// kernel: conv2d_channel_forward.3
$region0: #{conv2d_channel_forward.3}
  #allocation0 [shape = 'u32[]', space=smem, size = 0x4, offset = 0x4, fixed_abs, tag = 'smem constant byte address 0x4 - core index']
  #allocation1 [shape = 'u32[144,128]{1,0:T(1,128)}', space=vmem, size = 0x12000, scoped, tag = 'internal scratch']
  %s0 = inlined_call_operand.vmem [shape: f32[2,16,256], index: 0, kind: input, shape index: {}]
  %s1 = inlined_call_operand.vmem [shape: f32[16,16], index: 1, kind: input, shape index: {}]
  %s2 = inlined_call_operand.vmem [shape: f32[16,1], index: 2, kind: input, shape index: {}]
  %s3 = inlined_call_operand.vmem [shape: bf16[2,16,256], index: 3, kind: output, shape index: {0}]
  %s4 = inlined_call_operand.vmem [shape: f32[2,1,16,1], index: 4, kind: output, shape index: {1}]
  %s5 = inlined_call_operand.vmem [shape: f32[2,1,16,1], index: 5, kind: output, shape index: {2}]
  %6 = xla_tuple %s3, %s4, %s5
  %s7 = sld [smem:[#allocation0]]
  $region61: #{conv2d_channel_forward.3} parent=0
    _
  %s9 = ssub.s32 1, %s7
  %s10 = scalar_select 0, %s9, %s7
  loop: start=0, step=1, limit=4
  $region2: #{conv2d_channel_forward.3} parent=0 // loop_pre_header
    _
  $region3: #{conv2d_channel_forward.3} parent=0 // loop_header
    %s12 = sphi 0, %s16
    %p13 = scmp.ge.s32.totalorder %s12, 4
    %s19 = sphi 0, %s31
    %s20 = sphi 0, %s27
    %s21 = sphi 0, %s19
    %s22 = sphi 0, %s20
    %s23 = sphi 0, %s21
    %s24 = sphi 0, %s22
    %s36 = sphi 0, %s38
    %s39 = sphi 0, %s36
    %s40 = sphi 0, %s39
    %s56 = sphi 0, %s40
    %s60 = sphi 0, %s60
    %s62 = sphi 0, %s60
    %s63 = sphi 0, %s62
    %s77 = sphi 0, %s63
    %s81 = sphi 0, %s81
    %s83 = sphi 0, %s81
    %s84 = sphi 0, %s83
    %s98 = sphi 0, %s84
    %s106 = sphi 0, %s108
    %s109 = sphi 0, %s106
    %s110 = sphi 0, %s109
    %s126 = sphi 0, %s110
    %s134 = sphi 0, %s136
    %s137 = sphi 0, %s134
    %s138 = sphi 0, %s137
    %s154 = sphi 0, %s138
    %s162 = sphi 0, %s164
    %s165 = sphi 0, %s162
    %s166 = sphi 0, %s165
    %s182 = sphi 0, %s166
  $region4: #{conv2d_channel_forward.3} parent=0 // loop_header_branch
    %15 = sbr.rel (%p13) target = $region8
  $region5: #{conv2d_channel_forward.3} parent=0 // loop_body
    %s17 = ssub.s32 %s12, 1
    %s18 = ssub.s32 %s12, 2
    %s25 = sadd.s32 1, %s20
    %p26 = scmp.ge.s32.totalorder %s25, 1
    %s27 = scalar_select %p26, 0, %s25
    %s28 = sadd.s32 1, %s19
    %s29 = scalar_select %p26, %s28, %s19
    %p30 = scmp.ge.s32.totalorder %s29, 2
    %s31 = scalar_select %p30, 0, %s29
    %s32 = ssub.s32 %s19, %s31
    %s33 = ssub.s32 %s20, %s27
    %s34 = sor.u32 %s32, %s33
    %p35 = scmp.eq.s32.totalorder %s34, 0
    %s37 = sadd.s32 %s36, 1
    %s38 = scalar_select %p35, %s36, %s37
    %p41 = pneg %p35
    %p42 = scmp.eq.s32.totalorder %s12, 1
    %p43 = por %p41, %p42
    %p44 = scmp.ne.s32.totalorder %s36, %s39
    %p45 = scmp.eq.s32.totalorder %s12, 0
    %p46 = por %p44, %p45
    %p47 = scmp.ne.s32.totalorder %s36, %s39
    %p48 = scmp.eq.s32.totalorder %s17, 1
    %p49 = por %p47, %p48
    %p50 = scmp.ne.s32.totalorder %s39, %s40
    %p51 = scmp.eq.s32.totalorder %s17, 0
    %p52 = por %p50, %p51
    %p53 = scmp.ne.s32.totalorder %s39, %s40
    %p54 = scmp.eq.s32.totalorder %s18, 1
    %p55 = por %p53, %p54
    %p57 = scmp.ne.s32.totalorder %s40, %s56
    %p58 = scmp.eq.s32.totalorder %s18, 0
    %p59 = por %p57, %p58
    %s61 = sadd.s32 %s60, 1
    %p64 = scmp.eq.s32.totalorder %s12, 1
    %p65 = scmp.ne.s32.totalorder %s60, %s62
    %p66 = scmp.eq.s32.totalorder %s12, 0
    %p67 = por %p65, %p66
    %p68 = scmp.ne.s32.totalorder %s60, %s62
    %p69 = scmp.eq.s32.totalorder %s17, 1
    %p70 = por %p68, %p69
    %p71 = scmp.ne.s32.totalorder %s62, %s63
    %p72 = scmp.eq.s32.totalorder %s17, 0
    %p73 = por %p71, %p72
    %p74 = scmp.ne.s32.totalorder %s62, %s63
    %p75 = scmp.eq.s32.totalorder %s18, 1
    %p76 = por %p74, %p75
    %p78 = scmp.ne.s32.totalorder %s63, %s77
    %p79 = scmp.eq.s32.totalorder %s18, 0
    %p80 = por %p78, %p79
    %s82 = sadd.s32 %s81, 1
    %p85 = scmp.eq.s32.totalorder %s12, 1
    %p86 = scmp.ne.s32.totalorder %s81, %s83
    %p87 = scmp.eq.s32.totalorder %s12, 0
    %p88 = por %p86, %p87
    %p89 = scmp.ne.s32.totalorder %s81, %s83
    %p90 = scmp.eq.s32.totalorder %s17, 1
    %p91 = por %p89, %p90
    %p92 = scmp.ne.s32.totalorder %s83, %s84
    %p93 = scmp.eq.s32.totalorder %s17, 0
    %p94 = por %p92, %p93
    %p95 = scmp.ne.s32.totalorder %s83, %s84
    %p96 = scmp.eq.s32.totalorder %s18, 1
    %p97 = por %p95, %p96
    %p99 = scmp.ne.s32.totalorder %s84, %s98
    %p100 = scmp.eq.s32.totalorder %s18, 0
    %p101 = por %p99, %p100
    %s102 = ssub.s32 %s19, %s31
    %s103 = ssub.s32 %s20, %s27
    %s104 = sor.u32 %s102, %s103
    %p105 = scmp.eq.s32.totalorder %s104, 0
    %s107 = sadd.s32 %s106, 1
    %s108 = scalar_select %p105, %s106, %s107
    %p111 = pneg %p105
    %p112 = scmp.eq.s32.totalorder %s12, 1
    %p113 = por %p111, %p112
    %p114 = scmp.ne.s32.totalorder %s106, %s109
    %p115 = scmp.eq.s32.totalorder %s12, 0
    %p116 = por %p114, %p115
    %p117 = scmp.ne.s32.totalorder %s106, %s109
    %p118 = scmp.eq.s32.totalorder %s17, 1
    %p119 = por %p117, %p118
    %p120 = scmp.ne.s32.totalorder %s109, %s110
    %p121 = scmp.eq.s32.totalorder %s17, 0
    %p122 = por %p120, %p121
    %p123 = scmp.ne.s32.totalorder %s109, %s110
    %p124 = scmp.eq.s32.totalorder %s18, 1
    %p125 = por %p123, %p124
    %p127 = scmp.ne.s32.totalorder %s110, %s126
    %p128 = scmp.eq.s32.totalorder %s18, 0
    %p129 = por %p127, %p128
    %s130 = ssub.s32 %s19, %s31
    %s131 = ssub.s32 %s20, %s27
    %s132 = sor.u32 %s130, %s131
    %p133 = scmp.eq.s32.totalorder %s132, 0
    %s135 = sadd.s32 %s134, 1
    %s136 = scalar_select %p133, %s134, %s135
    %p139 = pneg %p133
    %p140 = scmp.eq.s32.totalorder %s12, 1
    %p141 = por %p139, %p140
    %p142 = scmp.ne.s32.totalorder %s134, %s137
    %p143 = scmp.eq.s32.totalorder %s12, 0
    %p144 = por %p142, %p143
    %p145 = scmp.ne.s32.totalorder %s134, %s137
    %p146 = scmp.eq.s32.totalorder %s17, 1
    %p147 = por %p145, %p146
    %p148 = scmp.ne.s32.totalorder %s137, %s138
    %p149 = scmp.eq.s32.totalorder %s17, 0
    %p150 = por %p148, %p149
    %p151 = scmp.ne.s32.totalorder %s137, %s138
    %p152 = scmp.eq.s32.totalorder %s18, 1
    %p153 = por %p151, %p152
    %p155 = scmp.ne.s32.totalorder %s138, %s154
    %p156 = scmp.eq.s32.totalorder %s18, 0
    %p157 = por %p155, %p156
    %s158 = ssub.s32 %s19, %s31
    %s159 = ssub.s32 %s20, %s27
    %s160 = sor.u32 %s158, %s159
    %p161 = scmp.eq.s32.totalorder %s160, 0
    %s163 = sadd.s32 %s162, 1
    %s164 = scalar_select %p161, %s162, %s163
    %p167 = pneg %p161
    %p168 = scmp.eq.s32.totalorder %s12, 1
    %p169 = por %p167, %p168
    %p170 = scmp.ne.s32.totalorder %s162, %s165
    %p171 = scmp.eq.s32.totalorder %s12, 0
    %p172 = por %p170, %p171
    %p173 = scmp.ne.s32.totalorder %s162, %s165
    %p174 = scmp.eq.s32.totalorder %s17, 1
    %p175 = por %p173, %p174
    %p176 = scmp.ne.s32.totalorder %s165, %s166
    %p177 = scmp.eq.s32.totalorder %s17, 0
    %p178 = por %p176, %p177
    %p179 = scmp.ne.s32.totalorder %s165, %s166
    %p180 = scmp.eq.s32.totalorder %s18, 1
    %p181 = por %p179, %p180
    %p183 = scmp.ne.s32.totalorder %s166, %s182
    %p184 = scmp.eq.s32.totalorder %s18, 0
    %p185 = por %p183, %p184
    %p186 = scmp.le.s32.totalorder 1, %s12
    %p187 = scmp.lt.s32.totalorder %s12, 3
    %p188 = pnand %p186, %p187
    %p189 = pneg %p188
    // Predicated region
    $region9: #{conv2d_channel_forward.3} parent=5 // pred_check
      _
    $region10: #{conv2d_channel_forward.3} parent=5 // pred_check_branch
      %191 = sbr.rel (%p188) target = $region12
    $region11: #{conv2d_channel_forward.3} parent=5 // pred_region
      %s192 = ssub.s32 %s12, 1
      // Predicated region
      $region13: #{conv2d_channel_forward.3} parent=11 // pred_check
        %p193 = pneg %p73
      $region14: #{conv2d_channel_forward.3} parent=11 // pred_check_branch
        %195 = sbr.rel (%p193) target = $region16
      $region15: #{conv2d_channel_forward.3} parent=11 // pred_region
        _
      $region16: #{conv2d_channel_forward.3} parent=11 // pred_fallthru
        _
      // Predicated region
      $region17: #{conv2d_channel_forward.3} parent=11 // pred_check
        %p196 = pneg %p94
      $region18: #{conv2d_channel_forward.3} parent=11 // pred_check_branch
        %198 = sbr.rel (%p196) target = $region20
      $region19: #{conv2d_channel_forward.3} parent=11 // pred_region
        _
      $region20: #{conv2d_channel_forward.3} parent=11 // pred_fallthru
        _
    $region12: #{conv2d_channel_forward.3} parent=5 // pred_fallthru
      _
    %p199 = scmp.lt.s32.totalorder %s12, 2
    // Predicated region
    $region21: #{conv2d_channel_forward.3} parent=5 // pred_check
      %p200 = pneg %p199
    $region22: #{conv2d_channel_forward.3} parent=5 // pred_check_branch
      %202 = sbr.rel (%p200) target = $region24
    $region23: #{conv2d_channel_forward.3} parent=5 // pred_region
      // Predicated region
      $region25: #{conv2d_channel_forward.3} parent=23 // pred_check
        %p203 = pneg %p46
      $region26: #{conv2d_channel_forward.3} parent=23 // pred_check_branch
        %205 = sbr.rel (%p203) target = $region28
      $region27: #{conv2d_channel_forward.3} parent=23 // pred_region
        %s206 = smul.u32 2, %s20
        %p207 = scmp.lt.s32.totalorder %s19, 1
        %s208 = scalar_select %p207, %s19, 1
        %p209 = scmp.lt.s32.totalorder %s206, 1
        %s210 = scalar_select %p209, %s206, 1
        %s211 = smul.addr %s208, 4
        %s212 = sadd.s32 %s210, %s211
        %s213 = smul.addr %s212, 8
        %s214 = scalar_lea.vmem %s0, %s213
        %s215 = smul.u32 2, %s20
      $region28: #{conv2d_channel_forward.3} parent=23 // pred_fallthru
        _
    $region24: #{conv2d_channel_forward.3} parent=5 // pred_fallthru
      _
    %p216 = scmp.le.s32.totalorder 1, %s12
    %p217 = scmp.lt.s32.totalorder %s12, 3
    %p218 = pnand %p216, %p217
    %p219 = pneg %p218
    // Predicated region
    $region29: #{conv2d_channel_forward.3} parent=5 // pred_check
      _
    $region30: #{conv2d_channel_forward.3} parent=5 // pred_check_branch
      %221 = sbr.rel (%p218) target = $region32
    $region31: #{conv2d_channel_forward.3} parent=5 // pred_region
      %s222 = ssub.s32 %s12, 1
      %s223 = smul.u32 2, %s22
      %p224 = scmp.lt.s32.totalorder %s21, 1
      %s225 = scalar_select %p224, %s21, 1
      %p226 = scmp.lt.s32.totalorder %s223, 1
      %s227 = scalar_select %p226, %s223, 1
      %s228 = smul.addr %s225, 4
      %s229 = sadd.s32 %s227, %s228
      %s230 = smul.addr %s229, 8
      %s231 = scalar_lea.vmem %s0, %s230
      %p232 = pneg %p52
      %p233 = pneg %p49
      %p234 = pneg %p73
      %p235 = pneg %p70
      %p236 = pneg %p94
      %p237 = pneg %p91
      %p238 = pneg %p122
      %p239 = pneg %p119
      %s240 = smul.u32 2, %s22
      %p241 = scmp.lt.s32.totalorder %s21, 1
      %s242 = scalar_select %p241, %s21, 1
      %p243 = scmp.lt.s32.totalorder %s240, 1
      %s244 = scalar_select %p243, %s240, 1
      %s245 = smul.addr %s242, 4
      %s246 = sadd.s32 %s244, %s245
      %s247 = smul.addr %s246, 4
      %s248 = scalar_lea.vmem %s3, %s247
      %p249 = pneg %p150
      %p250 = pneg %p147
      %p251 = scmp.lt.s32.totalorder %s21, 1
      %s252 = scalar_select %p251, %s21, 1
      %p253 = scmp.lt.s32.totalorder %s22, 0
      %s254 = scalar_select %p253, %s22, 0
      %s255 = smul.addr %s254, 2
      %s256 = smul.addr %s252, 2
      %s257 = sadd.s32 %s255, %s256
      %s258 = smul.addr %s257, 8
      %s259 = scalar_lea.vmem %s4, %s258
      %p260 = pneg %p178
      %p261 = pneg %p175
      %p262 = scmp.lt.s32.totalorder %s21, 1
      %s263 = scalar_select %p262, %s21, 1
      %p264 = scmp.lt.s32.totalorder %s22, 0
      %s265 = scalar_select %p264, %s22, 0
      %s266 = smul.addr %s265, 2
      %s267 = smul.addr %s263, 2
      %s268 = sadd.s32 %s266, %s267
      %s269 = smul.addr %s268, 8
      %s270 = scalar_lea.vmem %s5, %s269
      %s271 = smul.u32 2, %s22
      %p272 = scmp.lt.s32.totalorder %s21, 1
      %s273 = scalar_select %p272, %s21, 1
      %p274 = scmp.lt.s32.totalorder %s271, 1
      %s275 = scalar_select %p274, %s271, 1
      %s276 = smul.addr %s273, 4
      %s277 = sadd.s32 %s275, %s276
      %s278 = smul.addr %s277, 8
      %s279 = scalar_lea.vmem %s0, %s278
      %s280 = smul.u32 2, %s22
      %s281 = smul.u32 2, %s22
      %p282 = scmp.lt.s32.totalorder %s21, 1
      %s283 = scalar_select %p282, %s21, 1
      %p284 = scmp.lt.s32.totalorder %s281, 1
      %s285 = scalar_select %p284, %s281, 1
      %s286 = smul.addr %s283, 4
      %s287 = sadd.s32 %s285, %s286
      %s288 = smul.addr %s287, 4
      %s289 = scalar_lea.vmem %s3, %s288
      %s290 = smul.u32 2, %s22
      %p291 = scmp.lt.s32.totalorder %s21, 1
      %s292 = scalar_select %p291, %s21, 1
      %p293 = scmp.lt.s32.totalorder %s22, 0
      %s294 = scalar_select %p293, %s22, 0
      %s295 = smul.addr %s294, 2
      %s296 = smul.addr %s292, 2
      %s297 = sadd.s32 %s295, %s296
      %s298 = smul.addr %s297, 8
      %s299 = scalar_lea.vmem %s4, %s298
      %p300 = scmp.lt.s32.totalorder %s21, 1
      %s301 = scalar_select %p300, %s21, 1
      %p302 = scmp.lt.s32.totalorder %s22, 0
      %s303 = scalar_select %p302, %s22, 0
      %s304 = smul.addr %s303, 2
      %s305 = smul.addr %s301, 2
      %s306 = sadd.s32 %s304, %s305
      %s307 = smul.addr %s306, 8
      %s308 = scalar_lea.vmem %s5, %s307
      %v309 = vld [vmem:[%s1] sm:$0xff]
      %v310 = vld [vmem:[%s1 + $0x8] sm:$0xff]
      %v311 = vld [vmem:[%s279] sm:$0xff]
      %v312 = vld [vmem:[%s279 + $0x8] sm:$0xff]
      %v313 = vld [vmem:[%s279 + $0x10] sm:$0xff]
      %v314 = vld [vmem:[%s279 + $0x18] sm:$0xff]
      %v315 = vld [vmem:[%s2] sm:$0xff]
      %v316 = vld [vmem:[%s2 + $0x8] sm:$0xff]
      %318 = vset.pattern.permute.xlu0 0
      %319 = vperm.xlu0 %318, %v315
      %v320 = vpop.permute.xlu0 %319
      %323 = vset.pattern.permute.xlu0 0
      %324 = vperm.xlu0 %323, %v316
      %v325 = vpop.permute.xlu0 %324
      %vm327 = vcmask 130048
      %v329 = vsel %vm327, %v309, 0
      %v332 = vsel %vm327, %v310, 0
      %334 = vmatprep.subr.mxu0 %v312
      %335 = vmatpush1.msra.mxu0 %v311
      %336 = vmatprep.subr.mxu0 %v314
      %337 = vmatpush1.msra.mxu0 %v313
      %338 = vmatprep.subr.mxu0 0.0
      %339 = vmatpush1.msra.mxu0 0.0
      %340 = vmatprep.subr.mxu0 0.0
      %341 = vmatpush1.msra.mxu0 0.0
      %342 = vmatprep.subr.mxu0 0.0
      %343 = vmatpush1.msra.mxu0 0.0
      %344 = vmatprep.subr.mxu0 0.0
      %345 = vmatpush1.msra.mxu0 0.0
      %346 = vmatprep.subr.mxu0 0.0
      %347 = vmatpush1.msra.mxu0 0.0
      %348 = vmatprep.subr.mxu0 0.0
      %349 = vmatpush1.msra.mxu0 0.0
      %350 = vmatprep.subr.mxu0 0.0
      %351 = vmatpush1.msra.mxu0 0.0
      %352 = vmatprep.subr.mxu0 0.0
      %353 = vmatpush1.msra.mxu0 0.0
      %354 = vmatprep.subr.mxu0 0.0
      %355 = vmatpush1.msra.mxu0 0.0
      %356 = vmatprep.subr.mxu0 0.0
      %357 = vmatpush1.msra.mxu0 0.0
      %358 = vmatprep.subr.mxu0 0.0
      %359 = vmatpush1.msra.mxu0 0.0
      %360 = vmatprep.subr.mxu0 0.0
      %361 = vmatpush1.msra.mxu0 0.0
      %362 = vmatprep.subr.mxu0 0.0
      %363 = vmatpush1.msra.mxu0 0.0
      %364 = vmatprep.subr.mxu0 0.0
      %365 = vmatpush1.msra.mxu0 0.0
      %366 = vmatprep.subr.mxu0 0.0
      %367 = vmatpush1.msra.mxu0 0.0
      %368 = vmatprep.subr.mxu0 0.0
      %369 = vmatpush1.msra.mxu0 0.0
      %370 = vmatprep.subr.mxu0 0.0
      %371 = vmatpush1.msra.mxu0 0.0
      %372 = vmatprep.subr.mxu0 0.0
      %373 = vmatpush1.msra.mxu0 0.0
      %374 = vmatprep.subr.mxu0 0.0
      %375 = vmatpush1.msra.mxu0 0.0
      %376 = vmatprep.subr.mxu0 0.0
      %377 = vmatpush1.msra.mxu0 0.0
      %378 = vmatprep.subr.mxu0 0.0
      %379 = vmatpush1.msra.mxu0 0.0
      %380 = vmatprep.subr.mxu0 0.0
      %381 = vmatpush1.msra.mxu0 0.0
      %382 = vmatprep.subr.mxu0 0.0
      %383 = vmatpush1.msra.mxu0 0.0
      %384 = vmatprep.subr.mxu0 0.0
      %385 = vmatpush1.msra.mxu0 0.0
      %386 = vmatprep.subr.mxu0 0.0
      %387 = vmatpush1.msra.mxu0 0.0
      %388 = vmatprep.subr.mxu0 0.0
      %389 = vmatpush1.msra.mxu0 0.0
      %390 = vmatprep.subr.mxu0 0.0
      %391 = vmatpush1.msra.mxu0 0.0
      %392 = vmatprep.subr.mxu0 0.0
      %393 = vmatpush1.msra.mxu0 0.0
      %394 = vmatprep.subr.mxu0 0.0
      %395 = vmatpush1.msra.mxu0 0.0
      %396 = vmatprep.subr.mxu0 0.0
      %397 = vmatpush1.msra.mxu0 0.0
      %398 = vmatprep.mubr.f32.mxu0 0.0
      %399 = vmatmul.mubr.f32.gmra.mrb[0].mxu0 %v329
      %v400 = vpop.f32.mrb[0].mxu0
      %v401 = vadd.f32 %v320, %v400
      %v402 = vpop.f32.mrb[0].mxu0
      %v403 = vadd.f32 %v320, %v402
      %404 = vmatprep.mubr.f32.mxu0 0.0
      %405 = vmatmul.mubr.f32.gmra.mrb[0].mxu0 %v332
      %v406 = vpop.f32.mrb[0].mxu0
      %v407 = vadd.f32 %v325, %v406
      %v408 = vpop.f32.mrb[0].mxu0
      %v409 = vadd.f32 %v325, %v408
      %410 = vdwg.mxu0
      %v411 = vpack.c.bf16 %v407, %v401
      %v412 = vpack.c.bf16 %v409, %v403
      %v415 = vunpack.c.l.b16 %v411
      %v416 = vunpack.c.l.b16 %v412
      %v417 = vunpack.c.h.b16 %v411
      %v418 = vunpack.c.h.b16 %v412
      %v419 = vpack.c.b16 %v416, %v415
      %v420 = vpack.c.b16 %v418, %v417
      %423 = vst [vmem:[%s289] sm:$0xff] %v419
      %424 = vst [vmem:[%s289 + $0x8] sm:$0xff] %v420
      %v425 = vadd.f32 %v401, %v403
      %426 = vadd.xlane.f32.xlu0 %v425
      %v427 = vpop.xlane.xlu0 %426
      %v428 = vadd.f32 %v407, %v409
      %429 = vadd.xlane.f32.xlu0 %v428
      %v430 = vpop.xlane.xlu0 %429
      %vm431 = vcmask 7168
      %432 = vst.msk [vmem:[%s299] sm:$0xff] %vm431, %v427
      %433 = vst.msk [vmem:[%s299 + $0x8] sm:$0xff] %vm431, %v430
      %v434 = vmul.f32 %v401, %v401
      %v435 = vmul.f32 %v403, %v403
      %v436 = vmul.f32 %v407, %v407
      %v437 = vmul.f32 %v409, %v409
      %v438 = vadd.f32 %v434, %v435
      %439 = vadd.xlane.f32.xlu0 %v438
      %v440 = vpop.xlane.xlu0 %439
      %v441 = vadd.f32 %v436, %v437
      %442 = vadd.xlane.f32.xlu0 %v441
      %v443 = vpop.xlane.xlu0 %442
      %444 = vst.msk [vmem:[%s308] sm:$0xff] %vm431, %v440
      %445 = vst.msk [vmem:[%s308 + $0x8] sm:$0xff] %vm431, %v443
      %s446 = smul.u32 2, %s22
      %p447 = scmp.lt.s32.totalorder %s21, 1
      %s448 = scalar_select %p447, %s21, 1
      %p449 = scmp.lt.s32.totalorder %s446, 1
      %s450 = scalar_select %p449, %s446, 1
      %s451 = smul.addr %s448, 4
      %s452 = sadd.s32 %s450, %s451
      %s453 = smul.addr %s452, 4
      %s454 = scalar_lea.vmem %s3, %s453
      %p455 = scmp.lt.s32.totalorder %s21, 1
      %s456 = scalar_select %p455, %s21, 1
      %p457 = scmp.lt.s32.totalorder %s22, 0
      %s458 = scalar_select %p457, %s22, 0
      %s459 = smul.addr %s458, 2
      %s460 = smul.addr %s456, 2
      %s461 = sadd.s32 %s459, %s460
      %s462 = smul.addr %s461, 8
      %s463 = scalar_lea.vmem %s4, %s462
      %p464 = scmp.lt.s32.totalorder %s21, 1
      %s465 = scalar_select %p464, %s21, 1
      %p466 = scmp.lt.s32.totalorder %s22, 0
      %s467 = scalar_select %p466, %s22, 0
      %s468 = smul.addr %s467, 2
      %s469 = smul.addr %s465, 2
      %s470 = sadd.s32 %s468, %s469
      %s471 = smul.addr %s470, 8
      %s472 = scalar_lea.vmem %s5, %s471
      // Predicated region
      $region33: #{conv2d_channel_forward.3} parent=31 // pred_check
        %p473 = pneg %p119
      $region34: #{conv2d_channel_forward.3} parent=31 // pred_check_branch
        %475 = sbr.rel (%p473) target = $region36
      $region35: #{conv2d_channel_forward.3} parent=31 // pred_region
        %s476 = smul.u32 2, %s22
      $region36: #{conv2d_channel_forward.3} parent=31 // pred_fallthru
        _
      // Predicated region
      $region37: #{conv2d_channel_forward.3} parent=31 // pred_check
        %p477 = pneg %p147
      $region38: #{conv2d_channel_forward.3} parent=31 // pred_check_branch
        %479 = sbr.rel (%p477) target = $region40
      $region39: #{conv2d_channel_forward.3} parent=31 // pred_region
        _
      $region40: #{conv2d_channel_forward.3} parent=31 // pred_fallthru
        _
      // Predicated region
      $region41: #{conv2d_channel_forward.3} parent=31 // pred_check
        %p480 = pneg %p175
      $region42: #{conv2d_channel_forward.3} parent=31 // pred_check_branch
        %482 = sbr.rel (%p480) target = $region44
      $region43: #{conv2d_channel_forward.3} parent=31 // pred_region
        _
      $region44: #{conv2d_channel_forward.3} parent=31 // pred_fallthru
        _
    $region32: #{conv2d_channel_forward.3} parent=5 // pred_fallthru
      _
    %p483 = scmp.le.s32.totalorder 2, %s12
    // Predicated region
    $region45: #{conv2d_channel_forward.3} parent=5 // pred_check
      %p484 = pneg %p483
    $region46: #{conv2d_channel_forward.3} parent=5 // pred_check_branch
      %486 = sbr.rel (%p484) target = $region48
    $region47: #{conv2d_channel_forward.3} parent=5 // pred_region
      %s487 = ssub.s32 %s12, 2
      // Predicated region
      $region49: #{conv2d_channel_forward.3} parent=47 // pred_check
        %p488 = pneg %p125
      $region50: #{conv2d_channel_forward.3} parent=47 // pred_check_branch
        %490 = sbr.rel (%p488) target = $region52
      $region51: #{conv2d_channel_forward.3} parent=47 // pred_region
        %s491 = smul.u32 2, %s24
        %p492 = scmp.lt.s32.totalorder %s23, 1
        %s493 = scalar_select %p492, %s23, 1
        %p494 = scmp.lt.s32.totalorder %s491, 1
        %s495 = scalar_select %p494, %s491, 1
        %s496 = smul.addr %s493, 4
        %s497 = sadd.s32 %s495, %s496
        %s498 = smul.addr %s497, 4
        %s499 = scalar_lea.vmem %s3, %s498
      $region52: #{conv2d_channel_forward.3} parent=47 // pred_fallthru
        _
      // Predicated region
      $region53: #{conv2d_channel_forward.3} parent=47 // pred_check
        %p500 = pneg %p153
      $region54: #{conv2d_channel_forward.3} parent=47 // pred_check_branch
        %502 = sbr.rel (%p500) target = $region56
      $region55: #{conv2d_channel_forward.3} parent=47 // pred_region
        %p503 = scmp.lt.s32.totalorder %s23, 1
        %s504 = scalar_select %p503, %s23, 1
        %p505 = scmp.lt.s32.totalorder %s24, 0
        %s506 = scalar_select %p505, %s24, 0
        %s507 = smul.addr %s506, 2
        %s508 = smul.addr %s504, 2
        %s509 = sadd.s32 %s507, %s508
        %s510 = smul.addr %s509, 8
        %s511 = scalar_lea.vmem %s4, %s510
      $region56: #{conv2d_channel_forward.3} parent=47 // pred_fallthru
        _
      // Predicated region
      $region57: #{conv2d_channel_forward.3} parent=47 // pred_check
        %p512 = pneg %p181
      $region58: #{conv2d_channel_forward.3} parent=47 // pred_check_branch
        %514 = sbr.rel (%p512) target = $region60
      $region59: #{conv2d_channel_forward.3} parent=47 // pred_region
        %p515 = scmp.lt.s32.totalorder %s23, 1
        %s516 = scalar_select %p515, %s23, 1
        %p517 = scmp.lt.s32.totalorder %s24, 0
        %s518 = scalar_select %p517, %s24, 0
        %s519 = smul.addr %s518, 2
        %s520 = smul.addr %s516, 2
        %s521 = sadd.s32 %s519, %s520
        %s522 = smul.addr %s521, 8
        %s523 = scalar_lea.vmem %s5, %s522
      $region60: #{conv2d_channel_forward.3} parent=47 // pred_fallthru
        _
    $region48: #{conv2d_channel_forward.3} parent=5 // pred_fallthru
      _
  $region6: #{conv2d_channel_forward.3} parent=0 // loop_footer
    %s16 = sadd.s32 1, %s12
  $region7: #{conv2d_channel_forward.3} parent=0 // loop_footer_branch
    %11 = sbr.rel target = $region3
  $region8: #{conv2d_channel_forward.3} parent=0 // loop_exit
    _

// kernel: conv2d_channel_forward.4
$region0: #{conv2d_channel_forward.4}
  #allocation0 [shape = 'u32[]', space=smem, size = 0x4, offset = 0x4, fixed_abs, tag = 'smem constant byte address 0x4 - core index']
  #allocation1 [shape = 'u32[144,128]{1,0:T(1,128)}', space=vmem, size = 0x12000, scoped, tag = 'internal scratch']
  %s0 = inlined_call_operand.vmem [shape: bf16[2,16,256], index: 0, kind: input, shape index: {}]
  %s1 = inlined_call_operand.vmem [shape: f32[16,1], index: 1, kind: input, shape index: {}]
  %s2 = inlined_call_operand.vmem [shape: f32[16,1], index: 2, kind: input, shape index: {}]
  %s3 = inlined_call_operand.vmem [shape: f32[2,1,16,1], index: 3, kind: output, shape index: {0}]
  %s4 = inlined_call_operand.vmem [shape: f32[2,1,16,1], index: 4, kind: output, shape index: {1}]
  %5 = xla_tuple %s3, %s4
  %s6 = sld [smem:[#allocation0]]
  $region53: #{conv2d_channel_forward.4} parent=0
    _
  %s8 = ssub.s32 1, %s6
  %s9 = scalar_select 0, %s8, %s6
  loop: start=0, step=1, limit=4
  $region2: #{conv2d_channel_forward.4} parent=0 // loop_pre_header
    _
  $region3: #{conv2d_channel_forward.4} parent=0 // loop_header
    %s11 = sphi 0, %s15
    %p12 = scmp.ge.s32.totalorder %s11, 4
    %s18 = sphi 0, %s30
    %s19 = sphi 0, %s26
    %s20 = sphi 0, %s18
    %s21 = sphi 0, %s19
    %s22 = sphi 0, %s20
    %s23 = sphi 0, %s21
    %s35 = sphi 0, %s37
    %s38 = sphi 0, %s35
    %s39 = sphi 0, %s38
    %s55 = sphi 0, %s39
    %s59 = sphi 0, %s59
    %s61 = sphi 0, %s59
    %s62 = sphi 0, %s61
    %s76 = sphi 0, %s62
    %s80 = sphi 0, %s80
    %s82 = sphi 0, %s80
    %s83 = sphi 0, %s82
    %s97 = sphi 0, %s83
    %s105 = sphi 0, %s107
    %s108 = sphi 0, %s105
    %s109 = sphi 0, %s108
    %s125 = sphi 0, %s109
    %s133 = sphi 0, %s135
    %s136 = sphi 0, %s133
    %s137 = sphi 0, %s136
    %s153 = sphi 0, %s137
  $region4: #{conv2d_channel_forward.4} parent=0 // loop_header_branch
    %14 = sbr.rel (%p12) target = $region8
  $region5: #{conv2d_channel_forward.4} parent=0 // loop_body
    %s16 = ssub.s32 %s11, 1
    %s17 = ssub.s32 %s11, 2
    %s24 = sadd.s32 1, %s19
    %p25 = scmp.ge.s32.totalorder %s24, 1
    %s26 = scalar_select %p25, 0, %s24
    %s27 = sadd.s32 1, %s18
    %s28 = scalar_select %p25, %s27, %s18
    %p29 = scmp.ge.s32.totalorder %s28, 2
    %s30 = scalar_select %p29, 0, %s28
    %s31 = ssub.s32 %s18, %s30
    %s32 = ssub.s32 %s19, %s26
    %s33 = sor.u32 %s31, %s32
    %p34 = scmp.eq.s32.totalorder %s33, 0
    %s36 = sadd.s32 %s35, 1
    %s37 = scalar_select %p34, %s35, %s36
    %p40 = pneg %p34
    %p41 = scmp.eq.s32.totalorder %s11, 1
    %p42 = por %p40, %p41
    %p43 = scmp.ne.s32.totalorder %s35, %s38
    %p44 = scmp.eq.s32.totalorder %s11, 0
    %p45 = por %p43, %p44
    %p46 = scmp.ne.s32.totalorder %s35, %s38
    %p47 = scmp.eq.s32.totalorder %s16, 1
    %p48 = por %p46, %p47
    %p49 = scmp.ne.s32.totalorder %s38, %s39
    %p50 = scmp.eq.s32.totalorder %s16, 0
    %p51 = por %p49, %p50
    %p52 = scmp.ne.s32.totalorder %s38, %s39
    %p53 = scmp.eq.s32.totalorder %s17, 1
    %p54 = por %p52, %p53
    %p56 = scmp.ne.s32.totalorder %s39, %s55
    %p57 = scmp.eq.s32.totalorder %s17, 0
    %p58 = por %p56, %p57
    %s60 = sadd.s32 %s59, 1
    %p63 = scmp.eq.s32.totalorder %s11, 1
    %p64 = scmp.ne.s32.totalorder %s59, %s61
    %p65 = scmp.eq.s32.totalorder %s11, 0
    %p66 = por %p64, %p65
    %p67 = scmp.ne.s32.totalorder %s59, %s61
    %p68 = scmp.eq.s32.totalorder %s16, 1
    %p69 = por %p67, %p68
    %p70 = scmp.ne.s32.totalorder %s61, %s62
    %p71 = scmp.eq.s32.totalorder %s16, 0
    %p72 = por %p70, %p71
    %p73 = scmp.ne.s32.totalorder %s61, %s62
    %p74 = scmp.eq.s32.totalorder %s17, 1
    %p75 = por %p73, %p74
    %p77 = scmp.ne.s32.totalorder %s62, %s76
    %p78 = scmp.eq.s32.totalorder %s17, 0
    %p79 = por %p77, %p78
    %s81 = sadd.s32 %s80, 1
    %p84 = scmp.eq.s32.totalorder %s11, 1
    %p85 = scmp.ne.s32.totalorder %s80, %s82
    %p86 = scmp.eq.s32.totalorder %s11, 0
    %p87 = por %p85, %p86
    %p88 = scmp.ne.s32.totalorder %s80, %s82
    %p89 = scmp.eq.s32.totalorder %s16, 1
    %p90 = por %p88, %p89
    %p91 = scmp.ne.s32.totalorder %s82, %s83
    %p92 = scmp.eq.s32.totalorder %s16, 0
    %p93 = por %p91, %p92
    %p94 = scmp.ne.s32.totalorder %s82, %s83
    %p95 = scmp.eq.s32.totalorder %s17, 1
    %p96 = por %p94, %p95
    %p98 = scmp.ne.s32.totalorder %s83, %s97
    %p99 = scmp.eq.s32.totalorder %s17, 0
    %p100 = por %p98, %p99
    %s101 = ssub.s32 %s18, %s30
    %s102 = ssub.s32 %s19, %s26
    %s103 = sor.u32 %s101, %s102
    %p104 = scmp.eq.s32.totalorder %s103, 0
    %s106 = sadd.s32 %s105, 1
    %s107 = scalar_select %p104, %s105, %s106
    %p110 = pneg %p104
    %p111 = scmp.eq.s32.totalorder %s11, 1
    %p112 = por %p110, %p111
    %p113 = scmp.ne.s32.totalorder %s105, %s108
    %p114 = scmp.eq.s32.totalorder %s11, 0
    %p115 = por %p113, %p114
    %p116 = scmp.ne.s32.totalorder %s105, %s108
    %p117 = scmp.eq.s32.totalorder %s16, 1
    %p118 = por %p116, %p117
    %p119 = scmp.ne.s32.totalorder %s108, %s109
    %p120 = scmp.eq.s32.totalorder %s16, 0
    %p121 = por %p119, %p120
    %p122 = scmp.ne.s32.totalorder %s108, %s109
    %p123 = scmp.eq.s32.totalorder %s17, 1
    %p124 = por %p122, %p123
    %p126 = scmp.ne.s32.totalorder %s109, %s125
    %p127 = scmp.eq.s32.totalorder %s17, 0
    %p128 = por %p126, %p127
    %s129 = ssub.s32 %s18, %s30
    %s130 = ssub.s32 %s19, %s26
    %s131 = sor.u32 %s129, %s130
    %p132 = scmp.eq.s32.totalorder %s131, 0
    %s134 = sadd.s32 %s133, 1
    %s135 = scalar_select %p132, %s133, %s134
    %p138 = pneg %p132
    %p139 = scmp.eq.s32.totalorder %s11, 1
    %p140 = por %p138, %p139
    %p141 = scmp.ne.s32.totalorder %s133, %s136
    %p142 = scmp.eq.s32.totalorder %s11, 0
    %p143 = por %p141, %p142
    %p144 = scmp.ne.s32.totalorder %s133, %s136
    %p145 = scmp.eq.s32.totalorder %s16, 1
    %p146 = por %p144, %p145
    %p147 = scmp.ne.s32.totalorder %s136, %s137
    %p148 = scmp.eq.s32.totalorder %s16, 0
    %p149 = por %p147, %p148
    %p150 = scmp.ne.s32.totalorder %s136, %s137
    %p151 = scmp.eq.s32.totalorder %s17, 1
    %p152 = por %p150, %p151
    %p154 = scmp.ne.s32.totalorder %s137, %s153
    %p155 = scmp.eq.s32.totalorder %s17, 0
    %p156 = por %p154, %p155
    %p157 = scmp.le.s32.totalorder 1, %s11
    %p158 = scmp.lt.s32.totalorder %s11, 3
    %p159 = pnand %p157, %p158
    %p160 = pneg %p159
    // Predicated region
    $region9: #{conv2d_channel_forward.4} parent=5 // pred_check
      _
    $region10: #{conv2d_channel_forward.4} parent=5 // pred_check_branch
      %162 = sbr.rel (%p159) target = $region12
    $region11: #{conv2d_channel_forward.4} parent=5 // pred_region
      %s163 = ssub.s32 %s11, 1
      // Predicated region
      $region13: #{conv2d_channel_forward.4} parent=11 // pred_check
        %p164 = pneg %p72
      $region14: #{conv2d_channel_forward.4} parent=11 // pred_check_branch
        %166 = sbr.rel (%p164) target = $region16
      $region15: #{conv2d_channel_forward.4} parent=11 // pred_region
        _
      $region16: #{conv2d_channel_forward.4} parent=11 // pred_fallthru
        _
      // Predicated region
      $region17: #{conv2d_channel_forward.4} parent=11 // pred_check
        %p167 = pneg %p93
      $region18: #{conv2d_channel_forward.4} parent=11 // pred_check_branch
        %169 = sbr.rel (%p167) target = $region20
      $region19: #{conv2d_channel_forward.4} parent=11 // pred_region
        _
      $region20: #{conv2d_channel_forward.4} parent=11 // pred_fallthru
        _
    $region12: #{conv2d_channel_forward.4} parent=5 // pred_fallthru
      _
    %p170 = scmp.lt.s32.totalorder %s11, 2
    // Predicated region
    $region21: #{conv2d_channel_forward.4} parent=5 // pred_check
      %p171 = pneg %p170
    $region22: #{conv2d_channel_forward.4} parent=5 // pred_check_branch
      %173 = sbr.rel (%p171) target = $region24
    $region23: #{conv2d_channel_forward.4} parent=5 // pred_region
      // Predicated region
      $region25: #{conv2d_channel_forward.4} parent=23 // pred_check
        %p174 = pneg %p45
      $region26: #{conv2d_channel_forward.4} parent=23 // pred_check_branch
        %176 = sbr.rel (%p174) target = $region28
      $region27: #{conv2d_channel_forward.4} parent=23 // pred_region
        %s177 = smul.u32 2, %s19
        %p178 = scmp.lt.s32.totalorder %s18, 1
        %s179 = scalar_select %p178, %s18, 1
        %p180 = scmp.lt.s32.totalorder %s177, 1
        %s181 = scalar_select %p180, %s177, 1
        %s182 = smul.addr %s179, 4
        %s183 = sadd.s32 %s181, %s182
        %s184 = smul.addr %s183, 4
        %s185 = scalar_lea.vmem %s0, %s184
        %s186 = smul.u32 2, %s19
      $region28: #{conv2d_channel_forward.4} parent=23 // pred_fallthru
        _
    $region24: #{conv2d_channel_forward.4} parent=5 // pred_fallthru
      _
    %p187 = scmp.le.s32.totalorder 1, %s11
    %p188 = scmp.lt.s32.totalorder %s11, 3
    %p189 = pnand %p187, %p188
    %p190 = pneg %p189
    // Predicated region
    $region29: #{conv2d_channel_forward.4} parent=5 // pred_check
      _
    $region30: #{conv2d_channel_forward.4} parent=5 // pred_check_branch
      %192 = sbr.rel (%p189) target = $region32
    $region31: #{conv2d_channel_forward.4} parent=5 // pred_region
      %s193 = ssub.s32 %s11, 1
      %s194 = smul.u32 2, %s21
      %p195 = scmp.lt.s32.totalorder %s20, 1
      %s196 = scalar_select %p195, %s20, 1
      %p197 = scmp.lt.s32.totalorder %s194, 1
      %s198 = scalar_select %p197, %s194, 1
      %s199 = smul.addr %s196, 4
      %s200 = sadd.s32 %s198, %s199
      %s201 = smul.addr %s200, 4
      %s202 = scalar_lea.vmem %s0, %s201
      %p203 = pneg %p51
      %p204 = pneg %p48
      %p205 = pneg %p72
      %p206 = pneg %p69
      %p207 = pneg %p93
      %p208 = pneg %p90
      %p209 = pneg %p121
      %p210 = pneg %p118
      %p211 = scmp.lt.s32.totalorder %s20, 1
      %s212 = scalar_select %p211, %s20, 1
      %p213 = scmp.lt.s32.totalorder %s21, 0
      %s214 = scalar_select %p213, %s21, 0
      %s215 = smul.addr %s214, 2
      %s216 = smul.addr %s212, 2
      %s217 = sadd.s32 %s215, %s216
      %s218 = smul.addr %s217, 8
      %s219 = scalar_lea.vmem %s3, %s218
      %p220 = pneg %p149
      %p221 = pneg %p146
      %p222 = scmp.lt.s32.totalorder %s20, 1
      %s223 = scalar_select %p222, %s20, 1
      %p224 = scmp.lt.s32.totalorder %s21, 0
      %s225 = scalar_select %p224, %s21, 0
      %s226 = smul.addr %s225, 2
      %s227 = smul.addr %s223, 2
      %s228 = sadd.s32 %s226, %s227
      %s229 = smul.addr %s228, 8
      %s230 = scalar_lea.vmem %s4, %s229
      %s231 = smul.u32 2, %s21
      %p232 = scmp.lt.s32.totalorder %s20, 1
      %s233 = scalar_select %p232, %s20, 1
      %p234 = scmp.lt.s32.totalorder %s231, 1
      %s235 = scalar_select %p234, %s231, 1
      %s236 = smul.addr %s233, 4
      %s237 = sadd.s32 %s235, %s236
      %s238 = smul.addr %s237, 4
      %s239 = scalar_lea.vmem %s0, %s238
      %s240 = smul.u32 2, %s21
      %p241 = scmp.lt.s32.totalorder %s20, 1
      %s242 = scalar_select %p241, %s20, 1
      %p243 = scmp.lt.s32.totalorder %s21, 0
      %s244 = scalar_select %p243, %s21, 0
      %s245 = smul.addr %s244, 2
      %s246 = smul.addr %s242, 2
      %s247 = sadd.s32 %s245, %s246
      %s248 = smul.addr %s247, 8
      %s249 = scalar_lea.vmem %s3, %s248
      %p250 = scmp.lt.s32.totalorder %s20, 1
      %s251 = scalar_select %p250, %s20, 1
      %p252 = scmp.lt.s32.totalorder %s21, 0
      %s253 = scalar_select %p252, %s21, 0
      %s254 = smul.addr %s253, 2
      %s255 = smul.addr %s251, 2
      %s256 = sadd.s32 %s254, %s255
      %s257 = smul.addr %s256, 8
      %s258 = scalar_lea.vmem %s4, %s257
      %v259 = vld [vmem:[%s239] sm:$0xff]
      %v260 = vld [vmem:[%s239 + $0x8] sm:$0xff]
      %v261 = vunpack.c.l.bf16 %v259
      %v262 = vunpack.c.h.bf16 %v259
      %v263 = vunpack.c.l.bf16 %v260
      %v264 = vunpack.c.h.bf16 %v260
      %v265 = vld [vmem:[%s1] sm:$0xff]
      %v266 = vld [vmem:[%s1 + $0x8] sm:$0xff]
      %268 = vset.pattern.permute.xlu0 0
      %269 = vperm.xlu0 %268, %v265
      %v270 = vpop.permute.xlu0 %269
      %273 = vset.pattern.permute.xlu0 0
      %274 = vperm.xlu0 %273, %v266
      %v275 = vpop.permute.xlu0 %274
      %v277 = vmul.f32 %v261, %v270
      %v278 = vmul.f32 %v262, %v270
      %v279 = vmul.f32 %v263, %v275
      %v280 = vmul.f32 %v264, %v275
      %v281 = vld [vmem:[%s2] sm:$0xff]
      %v282 = vld [vmem:[%s2 + $0x8] sm:$0xff]
      %284 = vset.pattern.permute.xlu0 0
      %285 = vperm.xlu0 %284, %v281
      %v286 = vpop.permute.xlu0 %285
      %289 = vset.pattern.permute.xlu0 0
      %290 = vperm.xlu0 %289, %v282
      %v291 = vpop.permute.xlu0 %290
      %v293 = vadd.f32 %v277, %v286
      %v294 = vadd.f32 %v278, %v286
      %v295 = vadd.f32 %v279, %v291
      %v296 = vadd.f32 %v280, %v291
      %v297 = vmul.f32 %v293, 0.01
      %v298 = vmul.f32 %v294, 0.01
      %v299 = vmul.f32 %v295, 0.01
      %v300 = vmul.f32 %v296, 0.01
      %v301 = vmax.f32 %v293, %v297
      %v302 = vmax.f32 %v294, %v298
      %v303 = vmax.f32 %v295, %v299
      %v304 = vmax.f32 %v296, %v300
      %v305 = vadd.f32 %v301, %v302
      %306 = vadd.xlane.f32.xlu0 %v305
      %v307 = vpop.xlane.xlu0 %306
      %v308 = vadd.f32 %v303, %v304
      %309 = vadd.xlane.f32.xlu0 %v308
      %v310 = vpop.xlane.xlu0 %309
      %vm311 = vcmask 7168
      %312 = vst.msk [vmem:[%s249] sm:$0xff] %vm311, %v307
      %313 = vst.msk [vmem:[%s249 + $0x8] sm:$0xff] %vm311, %v310
      %v314 = vmul.f32 %v301, %v301
      %v315 = vmul.f32 %v302, %v302
      %v316 = vmul.f32 %v303, %v303
      %v317 = vmul.f32 %v304, %v304
      %v318 = vadd.f32 %v314, %v315
      %319 = vadd.xlane.f32.xlu0 %v318
      %v320 = vpop.xlane.xlu0 %319
      %v321 = vadd.f32 %v316, %v317
      %322 = vadd.xlane.f32.xlu0 %v321
      %v323 = vpop.xlane.xlu0 %322
      %324 = vst.msk [vmem:[%s258] sm:$0xff] %vm311, %v320
      %325 = vst.msk [vmem:[%s258 + $0x8] sm:$0xff] %vm311, %v323
      %p326 = scmp.lt.s32.totalorder %s20, 1
      %s327 = scalar_select %p326, %s20, 1
      %p328 = scmp.lt.s32.totalorder %s21, 0
      %s329 = scalar_select %p328, %s21, 0
      %s330 = smul.addr %s329, 2
      %s331 = smul.addr %s327, 2
      %s332 = sadd.s32 %s330, %s331
      %s333 = smul.addr %s332, 8
      %s334 = scalar_lea.vmem %s3, %s333
      %p335 = scmp.lt.s32.totalorder %s20, 1
      %s336 = scalar_select %p335, %s20, 1
      %p337 = scmp.lt.s32.totalorder %s21, 0
      %s338 = scalar_select %p337, %s21, 0
      %s339 = smul.addr %s338, 2
      %s340 = smul.addr %s336, 2
      %s341 = sadd.s32 %s339, %s340
      %s342 = smul.addr %s341, 8
      %s343 = scalar_lea.vmem %s4, %s342
      // Predicated region
      $region33: #{conv2d_channel_forward.4} parent=31 // pred_check
        %p344 = pneg %p118
      $region34: #{conv2d_channel_forward.4} parent=31 // pred_check_branch
        %346 = sbr.rel (%p344) target = $region36
      $region35: #{conv2d_channel_forward.4} parent=31 // pred_region
        _
      $region36: #{conv2d_channel_forward.4} parent=31 // pred_fallthru
        _
      // Predicated region
      $region37: #{conv2d_channel_forward.4} parent=31 // pred_check
        %p347 = pneg %p146
      $region38: #{conv2d_channel_forward.4} parent=31 // pred_check_branch
        %349 = sbr.rel (%p347) target = $region40
      $region39: #{conv2d_channel_forward.4} parent=31 // pred_region
        _
      $region40: #{conv2d_channel_forward.4} parent=31 // pred_fallthru
        _
    $region32: #{conv2d_channel_forward.4} parent=5 // pred_fallthru
      _
    %p350 = scmp.le.s32.totalorder 2, %s11
    // Predicated region
    $region41: #{conv2d_channel_forward.4} parent=5 // pred_check
      %p351 = pneg %p350
    $region42: #{conv2d_channel_forward.4} parent=5 // pred_check_branch
      %353 = sbr.rel (%p351) target = $region44
    $region43: #{conv2d_channel_forward.4} parent=5 // pred_region
      %s354 = ssub.s32 %s11, 2
      // Predicated region
      $region45: #{conv2d_channel_forward.4} parent=43 // pred_check
        %p355 = pneg %p124
      $region46: #{conv2d_channel_forward.4} parent=43 // pred_check_branch
        %357 = sbr.rel (%p355) target = $region48
      $region47: #{conv2d_channel_forward.4} parent=43 // pred_region
        %p358 = scmp.lt.s32.totalorder %s22, 1
        %s359 = scalar_select %p358, %s22, 1
        %p360 = scmp.lt.s32.totalorder %s23, 0
        %s361 = scalar_select %p360, %s23, 0
        %s362 = smul.addr %s361, 2
        %s363 = smul.addr %s359, 2
        %s364 = sadd.s32 %s362, %s363
        %s365 = smul.addr %s364, 8
        %s366 = scalar_lea.vmem %s3, %s365
      $region48: #{conv2d_channel_forward.4} parent=43 // pred_fallthru
        _
      // Predicated region
      $region49: #{conv2d_channel_forward.4} parent=43 // pred_check
        %p367 = pneg %p152
      $region50: #{conv2d_channel_forward.4} parent=43 // pred_check_branch
        %369 = sbr.rel (%p367) target = $region52
      $region51: #{conv2d_channel_forward.4} parent=43 // pred_region
        %p370 = scmp.lt.s32.totalorder %s22, 1
        %s371 = scalar_select %p370, %s22, 1
        %p372 = scmp.lt.s32.totalorder %s23, 0
        %s373 = scalar_select %p372, %s23, 0
        %s374 = smul.addr %s373, 2
        %s375 = smul.addr %s371, 2
        %s376 = sadd.s32 %s374, %s375
        %s377 = smul.addr %s376, 8
        %s378 = scalar_lea.vmem %s4, %s377
      $region52: #{conv2d_channel_forward.4} parent=43 // pred_fallthru
        _
    $region44: #{conv2d_channel_forward.4} parent=5 // pred_fallthru
      _
  $region6: #{conv2d_channel_forward.4} parent=0 // loop_footer
    %s15 = sadd.s32 1, %s11
  $region7: #{conv2d_channel_forward.4} parent=0 // loop_footer_branch
    %10 = sbr.rel target = $region3
  $region8: #{conv2d_channel_forward.4} parent=0 // loop_exit
    _

// kernel: conv2d_channel_forward.5
$region0: #{conv2d_channel_forward.5}
  #allocation0 [shape = 'u32[]', space=smem, size = 0x4, offset = 0x4, fixed_abs, tag = 'smem constant byte address 0x4 - core index']
  #allocation1 [shape = 'u32[144,128]{1,0:T(1,128)}', space=vmem, size = 0x12000, scoped, tag = 'internal scratch']
  %s0 = inlined_call_operand.vmem [shape: bf16[2,16,256], index: 0, kind: input, shape index: {}]
  %s1 = inlined_call_operand.vmem [shape: f32[16,1], index: 1, kind: input, shape index: {}]
  %s2 = inlined_call_operand.vmem [shape: f32[16,1], index: 2, kind: input, shape index: {}]
  %s3 = inlined_call_operand.vmem [shape: f32[2,16,1], index: 3, kind: input, shape index: {}]
  %s4 = inlined_call_operand.vmem [shape: f32[16,1], index: 4, kind: input, shape index: {}]
  %s5 = inlined_call_operand.vmem [shape: f32[2,16,256], index: 5, kind: output, shape index: {}]
  %s6 = sld [smem:[#allocation0]]
  $region53: #{conv2d_channel_forward.5} parent=0
    _
  %s8 = ssub.s32 1, %s6
  %s9 = scalar_select 0, %s8, %s6
  loop: start=0, step=1, limit=4
  $region2: #{conv2d_channel_forward.5} parent=0 // loop_pre_header
    _
  $region3: #{conv2d_channel_forward.5} parent=0 // loop_header
    %s11 = sphi 0, %s15
    %p12 = scmp.ge.s32.totalorder %s11, 4
    %s18 = sphi 0, %s30
    %s19 = sphi 0, %s26
    %s20 = sphi 0, %s18
    %s21 = sphi 0, %s19
    %s22 = sphi 0, %s20
    %s23 = sphi 0, %s21
    %s35 = sphi 0, %s37
    %s38 = sphi 0, %s35
    %s39 = sphi 0, %s38
    %s55 = sphi 0, %s39
    %s59 = sphi 0, %s59
    %s61 = sphi 0, %s59
    %s62 = sphi 0, %s61
    %s76 = sphi 0, %s62
    %s80 = sphi 0, %s80
    %s82 = sphi 0, %s80
    %s83 = sphi 0, %s82
    %s97 = sphi 0, %s83
    %s103 = sphi 0, %s105
    %s106 = sphi 0, %s103
    %s107 = sphi 0, %s106
    %s123 = sphi 0, %s107
    %s127 = sphi 0, %s127
    %s129 = sphi 0, %s127
    %s130 = sphi 0, %s129
    %s144 = sphi 0, %s130
    %s152 = sphi 0, %s154
    %s155 = sphi 0, %s152
    %s156 = sphi 0, %s155
    %s172 = sphi 0, %s156
  $region4: #{conv2d_channel_forward.5} parent=0 // loop_header_branch
    %14 = sbr.rel (%p12) target = $region8
  $region5: #{conv2d_channel_forward.5} parent=0 // loop_body
    %s16 = ssub.s32 %s11, 1
    %s17 = ssub.s32 %s11, 2
    %s24 = sadd.s32 1, %s19
    %p25 = scmp.ge.s32.totalorder %s24, 1
    %s26 = scalar_select %p25, 0, %s24
    %s27 = sadd.s32 1, %s18
    %s28 = scalar_select %p25, %s27, %s18
    %p29 = scmp.ge.s32.totalorder %s28, 2
    %s30 = scalar_select %p29, 0, %s28
    %s31 = ssub.s32 %s18, %s30
    %s32 = ssub.s32 %s19, %s26
    %s33 = sor.u32 %s31, %s32
    %p34 = scmp.eq.s32.totalorder %s33, 0
    %s36 = sadd.s32 %s35, 1
    %s37 = scalar_select %p34, %s35, %s36
    %p40 = pneg %p34
    %p41 = scmp.eq.s32.totalorder %s11, 1
    %p42 = por %p40, %p41
    %p43 = scmp.ne.s32.totalorder %s35, %s38
    %p44 = scmp.eq.s32.totalorder %s11, 0
    %p45 = por %p43, %p44
    %p46 = scmp.ne.s32.totalorder %s35, %s38
    %p47 = scmp.eq.s32.totalorder %s16, 1
    %p48 = por %p46, %p47
    %p49 = scmp.ne.s32.totalorder %s38, %s39
    %p50 = scmp.eq.s32.totalorder %s16, 0
    %p51 = por %p49, %p50
    %p52 = scmp.ne.s32.totalorder %s38, %s39
    %p53 = scmp.eq.s32.totalorder %s17, 1
    %p54 = por %p52, %p53
    %p56 = scmp.ne.s32.totalorder %s39, %s55
    %p57 = scmp.eq.s32.totalorder %s17, 0
    %p58 = por %p56, %p57
    %s60 = sadd.s32 %s59, 1
    %p63 = scmp.eq.s32.totalorder %s11, 1
    %p64 = scmp.ne.s32.totalorder %s59, %s61
    %p65 = scmp.eq.s32.totalorder %s11, 0
    %p66 = por %p64, %p65
    %p67 = scmp.ne.s32.totalorder %s59, %s61
    %p68 = scmp.eq.s32.totalorder %s16, 1
    %p69 = por %p67, %p68
    %p70 = scmp.ne.s32.totalorder %s61, %s62
    %p71 = scmp.eq.s32.totalorder %s16, 0
    %p72 = por %p70, %p71
    %p73 = scmp.ne.s32.totalorder %s61, %s62
    %p74 = scmp.eq.s32.totalorder %s17, 1
    %p75 = por %p73, %p74
    %p77 = scmp.ne.s32.totalorder %s62, %s76
    %p78 = scmp.eq.s32.totalorder %s17, 0
    %p79 = por %p77, %p78
    %s81 = sadd.s32 %s80, 1
    %p84 = scmp.eq.s32.totalorder %s11, 1
    %p85 = scmp.ne.s32.totalorder %s80, %s82
    %p86 = scmp.eq.s32.totalorder %s11, 0
    %p87 = por %p85, %p86
    %p88 = scmp.ne.s32.totalorder %s80, %s82
    %p89 = scmp.eq.s32.totalorder %s16, 1
    %p90 = por %p88, %p89
    %p91 = scmp.ne.s32.totalorder %s82, %s83
    %p92 = scmp.eq.s32.totalorder %s16, 0
    %p93 = por %p91, %p92
    %p94 = scmp.ne.s32.totalorder %s82, %s83
    %p95 = scmp.eq.s32.totalorder %s17, 1
    %p96 = por %p94, %p95
    %p98 = scmp.ne.s32.totalorder %s83, %s97
    %p99 = scmp.eq.s32.totalorder %s17, 0
    %p100 = por %p98, %p99
    %s101 = ssub.s32 %s18, %s30
    %p102 = scmp.eq.s32.totalorder %s101, 0
    %s104 = sadd.s32 %s103, 1
    %s105 = scalar_select %p102, %s103, %s104
    %p108 = pneg %p102
    %p109 = scmp.eq.s32.totalorder %s11, 1
    %p110 = por %p108, %p109
    %p111 = scmp.ne.s32.totalorder %s103, %s106
    %p112 = scmp.eq.s32.totalorder %s11, 0
    %p113 = por %p111, %p112
    %p114 = scmp.ne.s32.totalorder %s103, %s106
    %p115 = scmp.eq.s32.totalorder %s16, 1
    %p116 = por %p114, %p115
    %p117 = scmp.ne.s32.totalorder %s106, %s107
    %p118 = scmp.eq.s32.totalorder %s16, 0
    %p119 = por %p117, %p118
    %p120 = scmp.ne.s32.totalorder %s106, %s107
    %p121 = scmp.eq.s32.totalorder %s17, 1
    %p122 = por %p120, %p121
    %p124 = scmp.ne.s32.totalorder %s107, %s123
    %p125 = scmp.eq.s32.totalorder %s17, 0
    %p126 = por %p124, %p125
    %s128 = sadd.s32 %s127, 1
    %p131 = scmp.eq.s32.totalorder %s11, 1
    %p132 = scmp.ne.s32.totalorder %s127, %s129
    %p133 = scmp.eq.s32.totalorder %s11, 0
    %p134 = por %p132, %p133
    %p135 = scmp.ne.s32.totalorder %s127, %s129
    %p136 = scmp.eq.s32.totalorder %s16, 1
    %p137 = por %p135, %p136
    %p138 = scmp.ne.s32.totalorder %s129, %s130
    %p139 = scmp.eq.s32.totalorder %s16, 0
    %p140 = por %p138, %p139
    %p141 = scmp.ne.s32.totalorder %s129, %s130
    %p142 = scmp.eq.s32.totalorder %s17, 1
    %p143 = por %p141, %p142
    %p145 = scmp.ne.s32.totalorder %s130, %s144
    %p146 = scmp.eq.s32.totalorder %s17, 0
    %p147 = por %p145, %p146
    %s148 = ssub.s32 %s18, %s30
    %s149 = ssub.s32 %s19, %s26
    %s150 = sor.u32 %s148, %s149
    %p151 = scmp.eq.s32.totalorder %s150, 0
    %s153 = sadd.s32 %s152, 1
    %s154 = scalar_select %p151, %s152, %s153
    %p157 = pneg %p151
    %p158 = scmp.eq.s32.totalorder %s11, 1
    %p159 = por %p157, %p158
    %p160 = scmp.ne.s32.totalorder %s152, %s155
    %p161 = scmp.eq.s32.totalorder %s11, 0
    %p162 = por %p160, %p161
    %p163 = scmp.ne.s32.totalorder %s152, %s155
    %p164 = scmp.eq.s32.totalorder %s16, 1
    %p165 = por %p163, %p164
    %p166 = scmp.ne.s32.totalorder %s155, %s156
    %p167 = scmp.eq.s32.totalorder %s16, 0
    %p168 = por %p166, %p167
    %p169 = scmp.ne.s32.totalorder %s155, %s156
    %p170 = scmp.eq.s32.totalorder %s17, 1
    %p171 = por %p169, %p170
    %p173 = scmp.ne.s32.totalorder %s156, %s172
    %p174 = scmp.eq.s32.totalorder %s17, 0
    %p175 = por %p173, %p174
    %p176 = scmp.le.s32.totalorder 1, %s11
    %p177 = scmp.lt.s32.totalorder %s11, 3
    %p178 = pnand %p176, %p177
    %p179 = pneg %p178
    // Predicated region
    $region9: #{conv2d_channel_forward.5} parent=5 // pred_check
      _
    $region10: #{conv2d_channel_forward.5} parent=5 // pred_check_branch
      %181 = sbr.rel (%p178) target = $region12
    $region11: #{conv2d_channel_forward.5} parent=5 // pred_region
      %s182 = ssub.s32 %s11, 1
      // Predicated region
      $region13: #{conv2d_channel_forward.5} parent=11 // pred_check
        %p183 = pneg %p72
      $region14: #{conv2d_channel_forward.5} parent=11 // pred_check_branch
        %185 = sbr.rel (%p183) target = $region16
      $region15: #{conv2d_channel_forward.5} parent=11 // pred_region
        _
      $region16: #{conv2d_channel_forward.5} parent=11 // pred_fallthru
        _
      // Predicated region
      $region17: #{conv2d_channel_forward.5} parent=11 // pred_check
        %p186 = pneg %p93
      $region18: #{conv2d_channel_forward.5} parent=11 // pred_check_branch
        %188 = sbr.rel (%p186) target = $region20
      $region19: #{conv2d_channel_forward.5} parent=11 // pred_region
        _
      $region20: #{conv2d_channel_forward.5} parent=11 // pred_fallthru
        _
      // Predicated region
      $region21: #{conv2d_channel_forward.5} parent=11 // pred_check
        %p189 = pneg %p140
      $region22: #{conv2d_channel_forward.5} parent=11 // pred_check_branch
        %191 = sbr.rel (%p189) target = $region24
      $region23: #{conv2d_channel_forward.5} parent=11 // pred_region
        _
      $region24: #{conv2d_channel_forward.5} parent=11 // pred_fallthru
        _
    $region12: #{conv2d_channel_forward.5} parent=5 // pred_fallthru
      _
    %p192 = scmp.lt.s32.totalorder %s11, 2
    // Predicated region
    $region25: #{conv2d_channel_forward.5} parent=5 // pred_check
      %p193 = pneg %p192
    $region26: #{conv2d_channel_forward.5} parent=5 // pred_check_branch
      %195 = sbr.rel (%p193) target = $region28
    $region27: #{conv2d_channel_forward.5} parent=5 // pred_region
      // Predicated region
      $region29: #{conv2d_channel_forward.5} parent=27 // pred_check
        %p196 = pneg %p45
      $region30: #{conv2d_channel_forward.5} parent=27 // pred_check_branch
        %198 = sbr.rel (%p196) target = $region32
      $region31: #{conv2d_channel_forward.5} parent=27 // pred_region
        %s199 = smul.u32 2, %s19
        %p200 = scmp.lt.s32.totalorder %s18, 1
        %s201 = scalar_select %p200, %s18, 1
        %p202 = scmp.lt.s32.totalorder %s199, 1
        %s203 = scalar_select %p202, %s199, 1
        %s204 = smul.addr %s201, 4
        %s205 = sadd.s32 %s203, %s204
        %s206 = smul.addr %s205, 4
        %s207 = scalar_lea.vmem %s0, %s206
        %s208 = smul.u32 2, %s19
      $region32: #{conv2d_channel_forward.5} parent=27 // pred_fallthru
        _
      // Predicated region
      $region33: #{conv2d_channel_forward.5} parent=27 // pred_check
        %p209 = pneg %p113
      $region34: #{conv2d_channel_forward.5} parent=27 // pred_check_branch
        %211 = sbr.rel (%p209) target = $region36
      $region35: #{conv2d_channel_forward.5} parent=27 // pred_region
        %p212 = scmp.lt.s32.totalorder %s18, 1
        %s213 = scalar_select %p212, %s18, 1
        %s214 = smul.addr %s213, 2
        %s215 = smul.addr %s214, 8
        %s216 = scalar_lea.vmem %s3, %s215
      $region36: #{conv2d_channel_forward.5} parent=27 // pred_fallthru
        _
    $region28: #{conv2d_channel_forward.5} parent=5 // pred_fallthru
      _
    %p217 = scmp.le.s32.totalorder 1, %s11
    %p218 = scmp.lt.s32.totalorder %s11, 3
    %p219 = pnand %p217, %p218
    %p220 = pneg %p219
    // Predicated region
    $region37: #{conv2d_channel_forward.5} parent=5 // pred_check
      _
    $region38: #{conv2d_channel_forward.5} parent=5 // pred_check_branch
      %222 = sbr.rel (%p219) target = $region40
    $region39: #{conv2d_channel_forward.5} parent=5 // pred_region
      %s223 = ssub.s32 %s11, 1
      %s224 = smul.u32 2, %s21
      %p225 = scmp.lt.s32.totalorder %s20, 1
      %s226 = scalar_select %p225, %s20, 1
      %p227 = scmp.lt.s32.totalorder %s224, 1
      %s228 = scalar_select %p227, %s224, 1
      %s229 = smul.addr %s226, 4
      %s230 = sadd.s32 %s228, %s229
      %s231 = smul.addr %s230, 4
      %s232 = scalar_lea.vmem %s0, %s231
      %p233 = pneg %p51
      %p234 = pneg %p48
      %p235 = pneg %p72
      %p236 = pneg %p69
      %p237 = pneg %p93
      %p238 = pneg %p90
      %p239 = scmp.lt.s32.totalorder %s20, 1
      %s240 = scalar_select %p239, %s20, 1
      %s241 = smul.addr %s240, 2
      %s242 = smul.addr %s241, 8
      %s243 = scalar_lea.vmem %s3, %s242
      %p244 = pneg %p119
      %p245 = pneg %p116
      %p246 = pneg %p140
      %p247 = pneg %p137
      %p248 = pneg %p168
      %p249 = pneg %p165
      %s250 = smul.u32 2, %s21
      %p251 = scmp.lt.s32.totalorder %s20, 1
      %s252 = scalar_select %p251, %s20, 1
      %p253 = scmp.lt.s32.totalorder %s250, 1
      %s254 = scalar_select %p253, %s250, 1
      %s255 = smul.addr %s252, 4
      %s256 = sadd.s32 %s254, %s255
      %s257 = smul.addr %s256, 8
      %s258 = scalar_lea.vmem %s5, %s257
      %s259 = smul.u32 2, %s21
      %p260 = scmp.lt.s32.totalorder %s20, 1
      %s261 = scalar_select %p260, %s20, 1
      %p262 = scmp.lt.s32.totalorder %s259, 1
      %s263 = scalar_select %p262, %s259, 1
      %s264 = smul.addr %s261, 4
      %s265 = sadd.s32 %s263, %s264
      %s266 = smul.addr %s265, 4
      %s267 = scalar_lea.vmem %s0, %s266
      %s268 = smul.u32 2, %s21
      %p269 = scmp.lt.s32.totalorder %s20, 1
      %s270 = scalar_select %p269, %s20, 1
      %s271 = smul.addr %s270, 2
      %s272 = smul.addr %s271, 8
      %s273 = scalar_lea.vmem %s3, %s272
      %s274 = smul.u32 2, %s21
      %p275 = scmp.lt.s32.totalorder %s20, 1
      %s276 = scalar_select %p275, %s20, 1
      %p277 = scmp.lt.s32.totalorder %s274, 1
      %s278 = scalar_select %p277, %s274, 1
      %s279 = smul.addr %s276, 4
      %s280 = sadd.s32 %s278, %s279
      %s281 = smul.addr %s280, 8
      %s282 = scalar_lea.vmem %s5, %s281
      %s283 = smul.u32 2, %s21
      %v284 = vld [vmem:[%s267] sm:$0xff]
      %v285 = vld [vmem:[%s267 + $0x8] sm:$0xff]
      %v286 = vunpack.c.l.bf16 %v284
      %v287 = vunpack.c.h.bf16 %v284
      %v288 = vunpack.c.l.bf16 %v285
      %v289 = vunpack.c.h.bf16 %v285
      %v290 = vld [vmem:[%s1] sm:$0xff]
      %v291 = vld [vmem:[%s1 + $0x8] sm:$0xff]
      %293 = vset.pattern.permute.xlu0 0
      %294 = vperm.xlu0 %293, %v290
      %v295 = vpop.permute.xlu0 %294
      %298 = vset.pattern.permute.xlu0 0
      %299 = vperm.xlu0 %298, %v291
      %v300 = vpop.permute.xlu0 %299
      %v302 = vmul.f32 %v286, %v295
      %v303 = vmul.f32 %v287, %v295
      %v304 = vmul.f32 %v288, %v300
      %v305 = vmul.f32 %v289, %v300
      %v306 = vld [vmem:[%s2] sm:$0xff]
      %v307 = vld [vmem:[%s2 + $0x8] sm:$0xff]
      %309 = vset.pattern.permute.xlu0 0
      %310 = vperm.xlu0 %309, %v306
      %v311 = vpop.permute.xlu0 %310
      %314 = vset.pattern.permute.xlu0 0
      %315 = vperm.xlu0 %314, %v307
      %v316 = vpop.permute.xlu0 %315
      %v318 = vadd.f32 %v302, %v311
      %v319 = vadd.f32 %v303, %v311
      %v320 = vadd.f32 %v304, %v316
      %v321 = vadd.f32 %v305, %v316
      %v322 = vmul.f32 %v318, 0.01
      %v323 = vmul.f32 %v319, 0.01
      %v324 = vmul.f32 %v320, 0.01
      %v325 = vmul.f32 %v321, 0.01
      %v326 = vmax.f32 %v318, %v322
      %v327 = vmax.f32 %v319, %v323
      %v328 = vmax.f32 %v320, %v324
      %v329 = vmax.f32 %v321, %v325
      %v330 = vld [vmem:[%s273] sm:$0xff]
      %v331 = vld [vmem:[%s273 + $0x8] sm:$0xff]
      %333 = vset.pattern.permute.xlu0 0
      %334 = vperm.xlu0 %333, %v330
      %v335 = vpop.permute.xlu0 %334
      %338 = vset.pattern.permute.xlu0 0
      %339 = vperm.xlu0 %338, %v331
      %v340 = vpop.permute.xlu0 %339
      %v342 = vmul.f32 %v326, %v335
      %v343 = vmul.f32 %v327, %v335
      %v344 = vmul.f32 %v328, %v340
      %v345 = vmul.f32 %v329, %v340
      %v346 = vld [vmem:[%s4] sm:$0xff]
      %v347 = vld [vmem:[%s4 + $0x8] sm:$0xff]
      %349 = vset.pattern.permute.xlu0 0
      %350 = vperm.xlu0 %349, %v346
      %v351 = vpop.permute.xlu0 %350
      %354 = vset.pattern.permute.xlu0 0
      %355 = vperm.xlu0 %354, %v347
      %v356 = vpop.permute.xlu0 %355
      %v358 = vadd.f32 %v342, %v351
      %v359 = vadd.f32 %v343, %v351
      %v360 = vadd.f32 %v344, %v356
      %v361 = vadd.f32 %v345, %v356
      %v362 = vmul.f32 %v358, 0.01
      %v363 = vmul.f32 %v359, 0.01
      %v364 = vmul.f32 %v360, 0.01
      %v365 = vmul.f32 %v361, 0.01
      %v366 = vmax.f32 %v358, %v362
      %v367 = vmax.f32 %v359, %v363
      %v368 = vmax.f32 %v360, %v364
      %v369 = vmax.f32 %v361, %v365
      %370 = vst [vmem:[%s282] sm:$0xff] %v366
      %371 = vst [vmem:[%s282 + $0x8] sm:$0xff] %v367
      %372 = vst [vmem:[%s282 + $0x10] sm:$0xff] %v368
      %373 = vst [vmem:[%s282 + $0x18] sm:$0xff] %v369
      %s374 = smul.u32 2, %s21
      %p375 = scmp.lt.s32.totalorder %s20, 1
      %s376 = scalar_select %p375, %s20, 1
      %p377 = scmp.lt.s32.totalorder %s374, 1
      %s378 = scalar_select %p377, %s374, 1
      %s379 = smul.addr %s376, 4
      %s380 = sadd.s32 %s378, %s379
      %s381 = smul.addr %s380, 8
      %s382 = scalar_lea.vmem %s5, %s381
      // Predicated region
      $region41: #{conv2d_channel_forward.5} parent=39 // pred_check
        %p383 = pneg %p165
      $region42: #{conv2d_channel_forward.5} parent=39 // pred_check_branch
        %385 = sbr.rel (%p383) target = $region44
      $region43: #{conv2d_channel_forward.5} parent=39 // pred_region
        %s386 = smul.u32 2, %s21
      $region44: #{conv2d_channel_forward.5} parent=39 // pred_fallthru
        _
    $region40: #{conv2d_channel_forward.5} parent=5 // pred_fallthru
      _
    %p387 = scmp.le.s32.totalorder 2, %s11
    // Predicated region
    $region45: #{conv2d_channel_forward.5} parent=5 // pred_check
      %p388 = pneg %p387
    $region46: #{conv2d_channel_forward.5} parent=5 // pred_check_branch
      %390 = sbr.rel (%p388) target = $region48
    $region47: #{conv2d_channel_forward.5} parent=5 // pred_region
      %s391 = ssub.s32 %s11, 2
      // Predicated region
      $region49: #{conv2d_channel_forward.5} parent=47 // pred_check
        %p392 = pneg %p171
      $region50: #{conv2d_channel_forward.5} parent=47 // pred_check_branch
        %394 = sbr.rel (%p392) target = $region52
      $region51: #{conv2d_channel_forward.5} parent=47 // pred_region
        %s395 = smul.u32 2, %s23
        %p396 = scmp.lt.s32.totalorder %s22, 1
        %s397 = scalar_select %p396, %s22, 1
        %p398 = scmp.lt.s32.totalorder %s395, 1
        %s399 = scalar_select %p398, %s395, 1
        %s400 = smul.addr %s397, 4
        %s401 = sadd.s32 %s399, %s400
        %s402 = smul.addr %s401, 8
        %s403 = scalar_lea.vmem %s5, %s402
      $region52: #{conv2d_channel_forward.5} parent=47 // pred_fallthru
        _
    $region48: #{conv2d_channel_forward.5} parent=5 // pred_fallthru
      _
  $region6: #{conv2d_channel_forward.5} parent=0 // loop_footer
    %s15 = sadd.s32 1, %s11
  $region7: #{conv2d_channel_forward.5} parent=0 // loop_footer_branch
    %10 = sbr.rel target = $region3
  $region8: #{conv2d_channel_forward.5} parent=0 // loop_exit
    _

</llo_original>
